<compile_context>
chip_gen: v7x
topology: tpu7x:2x2x1
jax: 0.10.0
libtpu: 0.0.40
codegen_flags: <defaults>
</compile_context>

<pallas_src>
import functools

import jax
import jax.numpy as jnp
from jax.experimental import pallas as pl
from jax.experimental.pallas import tpu as pltpu


def _round_up(x, m):
    return -(-x // m) * m


def _transition_kernel(s_ref, w_ref, b_ref, g_ref, beta_ref, o_ref,
                       *, num_layers, eps, c_real):
    # s_ref    : (TM, Cp)        activation tile (bf16 or f32)
    # w_ref    : (3*L, Cp, Cp)   stacked, pre-transposed linear weights
    # b_ref    : (3*L, Cp)       stacked biases (f32)
    # g_ref    : (1, Cp)         layernorm gamma (f32, zero-padded)
    # beta_ref : (1, Cp)         layernorm beta  (f32, zero-padded)
    c_pad = s_ref.shape[-1]
    mm_dtype = w_ref.dtype
    s = s_ref[...].astype(jnp.float32)

    # Static unroll is fine for the OpenComplex default (num_layers is 1-2).
    for l in range(num_layers):
        w1 = w_ref[3 * l + 0]
        w2 = w_ref[3 * l + 1]
        w3 = w_ref[3 * l + 2]
        b1 = b_ref[3 * l + 0]
        b2 = b_ref[3 * l + 1]
        b3 = b_ref[3 * l + 2]

        h = jnp.dot(s.astype(mm_dtype), w1,
                    preferred_element_type=jnp.float32) + b1
        h = jnp.maximum(h, 0.0)
        h = jnp.dot(h.astype(mm_dtype), w2,
                    preferred_element_type=jnp.float32) + b2
        h = jnp.maximum(h, 0.0)
        h = jnp.dot(h.astype(mm_dtype), w3,
                    preferred_element_type=jnp.float32) + b3
        s = s + h  # residual (f32)

    # Dropout: identity in eval mode.

    # LayerNorm over the channel (last) axis, f32.  If the channel dim was
    # padded to a multiple of 128, mask the statistics to the real C (padded
    # channels are zero by construction).
    if c_real == c_pad:
        mean = jnp.mean(s, axis=-1, keepdims=True)
        centered = s - mean
        var = jnp.mean(centered * centered, axis=-1, keepdims=True)
    else:
        mask = (jax.lax.broadcasted_iota(jnp.int32, (1, c_pad), 1)
                < c_real).astype(jnp.float32)
        inv_c = 1.0 / float(c_real)
        mean = jnp.sum(s, axis=-1, keepdims=True) * inv_c  # pad cols are zero
        centered = (s - mean) * mask
        var = jnp.sum(centered * centered, axis=-1, keepdims=True) * inv_c
    inv = jax.lax.rsqrt(var + eps)
    out = centered * inv * g_ref[...] + beta_ref[...]

    o_ref[...] = out.astype(o_ref.dtype)


def structure_module_transition(s, weights, biases, gamma, beta, *,
                                num_layers, eps=1e-5, tile_m=None,
                                matmul_dtype=jnp.bfloat16, out_dtype=None):
    """s: (..., C) activations. weights: (3*L, C, C) pre-transposed. biases: (3*L, C).

    matmul_dtype sets both the MXU input dtype and the activation I/O dtype at
    the pallas_call boundary (f32 accumulation always).  out_dtype defaults to
    matmul_dtype (bf16) to keep the output write lane-dense and mem-light.
    """
    orig_shape = s.shape
    c = orig_shape[-1]
    s2d = s.reshape(-1, c)
    n = s2d.shape[0]

    io_dtype = jnp.dtype(matmul_dtype)
    out_dtype = io_dtype if out_dtype is None else jnp.dtype(out_dtype)

    # --- channel padding: keep the lane dim a multiple of 128 so the output
    #     store stays lane-dense; LN stats are masked to the real C in-kernel.
    c_pad = max(128, _round_up(c, 128))

    w = weights.astype(io_dtype)
    b = biases.astype(jnp.float32)
    g2d = gamma.reshape(1, c).astype(jnp.float32)
    beta2d = beta.reshape(1, c).astype(jnp.float32)
    if c_pad != c:
        dc = c_pad - c
        w = jnp.pad(w, ((0, 0), (0, dc), (0, dc)))
        b = jnp.pad(b, ((0, 0), (0, dc)))
        g2d = jnp.pad(g2d, ((0, 0), (0, dc)))
        beta2d = jnp.pad(beta2d, ((0, 0), (0, dc)))
        s2d = jnp.pad(s2d, ((0, 0), (0, dc)))
    s2d = s2d.astype(io_dtype)

    # --- token tiling from a VMEM budget (not a fixed constant) ---
    io_bytes = io_dtype.itemsize
    out_bytes = out_dtype.itemsize
    resident = (3 * num_layers * c_pad * c_pad * io_bytes    # weights
                + 3 * num_layers * c_pad * 4                 # biases
                + 2 * c_pad * 4)                             # LN gamma/beta
    # per-row VMEM: double-buffered in/out tiles + f32 s/h intermediates.
    per_row = 2 * c_pad * io_bytes + 2 * c_pad * out_bytes + 3 * c_pad * 4
    if tile_m is None:
        budget = 24 * 1024 * 1024  # safe on v5e/v6e (128 MiB) and v7x (64 MiB)
        cap = max(8, ((budget - 2 * resident) // per_row) // 8 * 8)
        tile_m = min(1024, cap)
    tile_m = max(8, min(tile_m, _round_up(n, 8)))
    # Keep the grid length >= 2 so both v7x TensorCores get work.
    tile_m = min(tile_m, max(8, _round_up(pl.cdiv(n, 2), 8)))
    n_pad = _round_up(n, tile_m)
    if n_pad != n:
        s2d = jnp.pad(s2d, ((0, n_pad - n), (0, 0)))

    grid = (n_pad // tile_m,)
    kernel = functools.partial(_transition_kernel, num_layers=num_layers,
                               eps=eps, c_real=c)

    # Scheduling hint for XLA around the custom call (bf16 I/O accounted).
    flops = 2 * 3 * num_layers * n_pad * c_pad * c_pad
    bytes_accessed = (n_pad * c_pad * io_bytes        # activation in
                      + n_pad * c_pad * out_bytes     # activation out
                      + resident)
    cost = pl.CostEstimate(flops=flops, transcendentals=n_pad,
                           bytes_accessed=int(bytes_accessed))

    # Always pass an explicit scoped-VMEM limit: 16 MiB floor (v5e's default),
    # 48 MiB cap (leaves Mosaic headroom on v7x's 64 MiB physical VMEM).
    act_tile = tile_m * c_pad
    vmem_est = (2 * act_tile * io_bytes        # input tile, double-buffered
                + 2 * act_tile * out_bytes     # output tile, double-buffered
                + 4 * act_tile * 4             # f32 s/h intermediates + slack
                + 2 * resident)                # grid-invariant operands (2 bufs)
    vmem_limit = int(min(max(2 * vmem_est, 16 * 1024 * 1024),
                         48 * 1024 * 1024))

    # Grid-invariant operands (constant index_map) are small (< 2 MiB bf16 even
    # at c_s = 384), so default double-buffering is fine; we deliberately avoid
    # the fragile pipeline_mode fallback dance from the previous version.
    in_specs = [
        pl.BlockSpec((tile_m, c_pad), lambda i: (i, 0)),
        pl.BlockSpec((3 * num_layers, c_pad, c_pad), lambda i: (0, 0, 0)),
        pl.BlockSpec((3 * num_layers, c_pad), lambda i: (0, 0)),
        pl.BlockSpec((1, c_pad), lambda i: (0, 0)),
        pl.BlockSpec((1, c_pad), lambda i: (0, 0)),
    ]

    out = pl.pallas_call(
        kernel,
        out_shape=jax.ShapeDtypeStruct((n_pad, c_pad), out_dtype),
        grid_spec=pltpu.PrefetchScalarGridSpec(
            num_scalar_prefetch=0,
            grid=grid,
            in_specs=in_specs,
            out_specs=pl.BlockSpec((tile_m, c_pad), lambda i: (i, 0)),
        ),
        compiler_params=pltpu.CompilerParams(
            dimension_semantics=("parallel",),
            vmem_limit_bytes=vmem_limit),
        cost_estimate=cost,
    )(s2d, w, b, g2d, beta2d)

    if n_pad != n:
        out = out[:n]
    if c_pad != c:
        out = out[:, :c]
    return out.reshape(orig_shape[:-1] + (c,))


def _reference(s, weights, biases, gamma, beta, num_layers, eps=1e-5,
               matmul_dtype=jnp.bfloat16):
    """Pure-JAX reference with the same bf16-input / f32-accumulate matmuls."""
    x = s.astype(jnp.float32)
    w = weights.astype(matmul_dtype)
    for l in range(num_layers):
        h = jnp.dot(x.astype(matmul_dtype), w[3 * l + 0],
                    preferred_element_type=jnp.float32) + biases[3 * l + 0]
        h = jnp.maximum(h, 0.0)
        h = jnp.dot(h.astype(matmul_dtype), w[3 * l + 1],
                    preferred_element_type=jnp.float32) + biases[3 * l + 1]
        h = jnp.maximum(h, 0.0)
        h = jnp.dot(h.astype(matmul_dtype), w[3 * l + 2],
                    preferred_element_type=jnp.float32) + biases[3 * l + 2]
        x = x + h
    mean = jnp.mean(x, axis=-1, keepdims=True)
    var = jnp.mean((x - mean) ** 2, axis=-1, keepdims=True)
    return (x - mean) * jax.lax.rsqrt(var + eps) * gamma + beta


if __name__ == "__main__":
    # Module hyperparameters (small but lane-dense; real OpenComplex c_s = 384).
    c = 128
    num_layers = 2
    dropout_rate = 0.1  # unused at inference

    batch, seq = 2, 256  # 512 tokens -> 2 grid tiles (keeps v7x's 2 TCs busy)

    key = jax.random.PRNGKey(0)
    k_s, k_w, k_b, k_g, k_beta = jax.random.split(key, 5)

    s = jax.random.normal(k_s, (batch, seq, c), dtype=jnp.float32)

    # Deterministic synthetic parameters (shapes follow the module __init__):
    # each layer has 3 Linear(c, c) -> weight (c, c) stored pre-transposed,
    # bias (c,).  LayerNorm(c) -> gamma (c,), beta (c,).
    weights = (jax.random.normal(k_w, (3 * num_layers, c, c), dtype=jnp.float32)
               * 0.1)
    biases = (jax.random.normal(k_b, (3 * num_layers, c), dtype=jnp.float32)
              * 0.05)
    gamma = 1.0 + 0.1 * jax.random.normal(k_g, (c,), dtype=jnp.float32)
    beta = 0.1 * jax.random.normal(k_beta, (c,), dtype=jnp.float32)

    out = structure_module_transition(
        s, weights, biases, gamma, beta, num_layers=num_layers)
    out = jax.block_until_ready(out)
    assert out.shape == s.shape

    ref = _reference(s, weights, biases, gamma, beta, num_layers)
    out_f32 = out.astype(jnp.float32)
    max_err = float(jnp.max(jnp.abs(out_f32 - ref)))
    assert jnp.allclose(out_f32, ref, atol=2e-2, rtol=2e-2), (
        f"mismatch vs reference (max abs err {max_err})")

    print("KERNEL_OK")
</pallas_src>

<mosaic_0001>
module attributes {stable_mosaic.version = 11 : i64} {
  func.func @_transition_kernel(%arg0: i32, %arg1: memref<256x128xbf16, #tpu.memory_space<vmem>>, %arg2: memref<6x128x128xbf16, #tpu.memory_space<vmem>>, %arg3: memref<6x128xf32, #tpu.memory_space<vmem>>, %arg4: memref<1x128xf32, #tpu.memory_space<vmem>>, %arg5: memref<1x128xf32, #tpu.memory_space<vmem>>, %arg6: memref<256x128xbf16, #tpu.memory_space<vmem>>) attributes {dimension_semantics = [#tpu.dimension_semantics<parallel>], iteration_bounds = array<i64: 2>, scalar_prefetch = 0 : i64, scratch_operands = 0 : i64, tpu.core_type = #tpu.core_type<tc>, window_params = [{transform_indices = @transform_0, window_bounds = array<i64: 256, 128>}, {pipeline_mode = #tpu.pipeline_mode<synchronous>, transform_indices = @transform_1, window_bounds = array<i64: 6, 128, 128>}, {pipeline_mode = #tpu.pipeline_mode<synchronous>, transform_indices = @transform_2, window_bounds = array<i64: 6, 128>}, {pipeline_mode = #tpu.pipeline_mode<synchronous>, transform_indices = @transform_3, window_bounds = array<i64: 1, 128>}, {pipeline_mode = #tpu.pipeline_mode<synchronous>, transform_indices = @transform_4, window_bounds = array<i64: 1, 128>}, {transform_indices = @transform_5, window_bounds = array<i64: 256, 128>}]} {
    %c0 = arith.constant 0 : index
    %c0_0 = arith.constant 0 : index
    %0 = vector.load %arg1[%c0, %c0_0] : memref<256x128xbf16, #tpu.memory_space<vmem>>, vector<256x128xbf16>
    %1 = arith.extf %0 : vector<256x128xbf16> to vector<256x128xf32>
    %c0_1 = arith.constant 0 : index
    %c0_2 = arith.constant 0 : index
    %c0_3 = arith.constant 0 : index
    %2 = vector.load %arg2[%c0_1, %c0_2, %c0_3] : memref<6x128x128xbf16, #tpu.memory_space<vmem>>, vector<1x128x128xbf16>
    %3 = vector.shape_cast %2 : vector<1x128x128xbf16> to vector<128x128xbf16>
    %c1 = arith.constant 1 : index
    %c0_4 = arith.constant 0 : index
    %c0_5 = arith.constant 0 : index
    %4 = vector.load %arg2[%c1, %c0_4, %c0_5] : memref<6x128x128xbf16, #tpu.memory_space<vmem>>, vector<1x128x128xbf16>
    %5 = vector.shape_cast %4 : vector<1x128x128xbf16> to vector<128x128xbf16>
    %c2 = arith.constant 2 : index
    %c0_6 = arith.constant 0 : index
    %c0_7 = arith.constant 0 : index
    %6 = vector.load %arg2[%c2, %c0_6, %c0_7] : memref<6x128x128xbf16, #tpu.memory_space<vmem>>, vector<1x128x128xbf16>
    %7 = vector.shape_cast %6 : vector<1x128x128xbf16> to vector<128x128xbf16>
    %c0_8 = arith.constant 0 : index
    %c0_9 = arith.constant 0 : index
    %8 = vector.load %arg3[%c0_8, %c0_9] : memref<6x128xf32, #tpu.memory_space<vmem>>, vector<1x128xf32>
    %9 = vector.shape_cast %8 : vector<1x128xf32> to vector<128xf32>
    %c1_10 = arith.constant 1 : index
    %c0_11 = arith.constant 0 : index
    %10 = vector.load %arg3[%c1_10, %c0_11] : memref<6x128xf32, #tpu.memory_space<vmem>>, vector<1x128xf32>
    %11 = vector.shape_cast %10 : vector<1x128xf32> to vector<128xf32>
    %c2_12 = arith.constant 2 : index
    %c0_13 = arith.constant 0 : index
    %12 = vector.load %arg3[%c2_12, %c0_13] : memref<6x128xf32, #tpu.memory_space<vmem>>, vector<1x128xf32>
    %13 = vector.shape_cast %12 : vector<1x128xf32> to vector<128xf32>
    %14 = arith.truncf %1 : vector<256x128xf32> to vector<256x128xbf16>
    %cst = arith.constant dense<0.000000e+00> : vector<256x128xf32>
    %15 = tpu.matmul %14, %3, %cst {dimension_numbers = #tpu.dot_dimension_numbers<[1], [0], [0], [1], [0, 0, 1, 1], [], []>} : vector<256x128xbf16>, vector<128x128xbf16>, vector<256x128xf32> -> vector<256x128xf32>
    %16 = vector.shape_cast %9 : vector<128xf32> to vector<1x128xf32>
    %17 = vector.broadcast %16 : vector<1x128xf32> to vector<256x128xf32>
    %18 = arith.addf %15, %17 : vector<256x128xf32>
    %cst_14 = arith.constant 0.000000e+00 : f32
    %19 = vector.broadcast %cst_14 : f32 to vector<256x128xf32>
    %20 = arith.maximumf %18, %19 : vector<256x128xf32>
    %21 = arith.truncf %20 : vector<256x128xf32> to vector<256x128xbf16>
    %cst_15 = arith.constant dense<0.000000e+00> : vector<256x128xf32>
    %22 = tpu.matmul %21, %5, %cst_15 {dimension_numbers = #tpu.dot_dimension_numbers<[1], [0], [0], [1], [0, 0, 1, 1], [], []>} : vector<256x128xbf16>, vector<128x128xbf16>, vector<256x128xf32> -> vector<256x128xf32>
    %23 = vector.shape_cast %11 : vector<128xf32> to vector<1x128xf32>
    %24 = vector.broadcast %23 : vector<1x128xf32> to vector<256x128xf32>
    %25 = arith.addf %22, %24 : vector<256x128xf32>
    %cst_16 = arith.constant 0.000000e+00 : f32
    %26 = vector.broadcast %cst_16 : f32 to vector<256x128xf32>
    %27 = arith.maximumf %25, %26 : vector<256x128xf32>
    %28 = arith.truncf %27 : vector<256x128xf32> to vector<256x128xbf16>
    %cst_17 = arith.constant dense<0.000000e+00> : vector<256x128xf32>
    %29 = tpu.matmul %28, %7, %cst_17 {dimension_numbers = #tpu.dot_dimension_numbers<[1], [0], [0], [1], [0, 0, 1, 1], [], []>} : vector<256x128xbf16>, vector<128x128xbf16>, vector<256x128xf32> -> vector<256x128xf32>
    %30 = vector.shape_cast %13 : vector<128xf32> to vector<1x128xf32>
    %31 = vector.broadcast %30 : vector<1x128xf32> to vector<256x128xf32>
    %32 = arith.addf %29, %31 : vector<256x128xf32>
    %33 = arith.addf %1, %32 : vector<256x128xf32>
    %c3 = arith.constant 3 : index
    %c0_18 = arith.constant 0 : index
    %c0_19 = arith.constant 0 : index
    %34 = vector.load %arg2[%c3, %c0_18, %c0_19] : memref<6x128x128xbf16, #tpu.memory_space<vmem>>, vector<1x128x128xbf16>
    %35 = vector.shape_cast %34 : vector<1x128x128xbf16> to vector<128x128xbf16>
    %c4 = arith.constant 4 : index
    %c0_20 = arith.constant 0 : index
    %c0_21 = arith.constant 0 : index
    %36 = vector.load %arg2[%c4, %c0_20, %c0_21] : memref<6x128x128xbf16, #tpu.memory_space<vmem>>, vector<1x128x128xbf16>
    %37 = vector.shape_cast %36 : vector<1x128x128xbf16> to vector<128x128xbf16>
    %c5 = arith.constant 5 : index
    %c0_22 = arith.constant 0 : index
    %c0_23 = arith.constant 0 : index
    %38 = vector.load %arg2[%c5, %c0_22, %c0_23] : memref<6x128x128xbf16, #tpu.memory_space<vmem>>, vector<1x128x128xbf16>
    %39 = vector.shape_cast %38 : vector<1x128x128xbf16> to vector<128x128xbf16>
    %c3_24 = arith.constant 3 : index
    %c0_25 = arith.constant 0 : index
    %40 = vector.load %arg3[%c3_24, %c0_25] : memref<6x128xf32, #tpu.memory_space<vmem>>, vector<1x128xf32>
    %41 = vector.shape_cast %40 : vector<1x128xf32> to vector<128xf32>
    %c4_26 = arith.constant 4 : index
    %c0_27 = arith.constant 0 : index
    %42 = vector.load %arg3[%c4_26, %c0_27] : memref<6x128xf32, #tpu.memory_space<vmem>>, vector<1x128xf32>
    %43 = vector.shape_cast %42 : vector<1x128xf32> to vector<128xf32>
    %c5_28 = arith.constant 5 : index
    %c0_29 = arith.constant 0 : index
    %44 = vector.load %arg3[%c5_28, %c0_29] : memref<6x128xf32, #tpu.memory_space<vmem>>, vector<1x128xf32>
    %45 = vector.shape_cast %44 : vector<1x128xf32> to vector<128xf32>
    %46 = arith.truncf %33 : vector<256x128xf32> to vector<256x128xbf16>
    %cst_30 = arith.constant dense<0.000000e+00> : vector<256x128xf32>
    %47 = tpu.matmul %46, %35, %cst_30 {dimension_numbers = #tpu.dot_dimension_numbers<[1], [0], [0], [1], [0, 0, 1, 1], [], []>} : vector<256x128xbf16>, vector<128x128xbf16>, vector<256x128xf32> -> vector<256x128xf32>
    %48 = vector.shape_cast %41 : vector<128xf32> to vector<1x128xf32>
    %49 = vector.broadcast %48 : vector<1x128xf32> to vector<256x128xf32>
    %50 = arith.addf %47, %49 : vector<256x128xf32>
    %cst_31 = arith.constant 0.000000e+00 : f32
    %51 = vector.broadcast %cst_31 : f32 to vector<256x128xf32>
    %52 = arith.maximumf %50, %51 : vector<256x128xf32>
    %53 = arith.truncf %52 : vector<256x128xf32> to vector<256x128xbf16>
    %cst_32 = arith.constant dense<0.000000e+00> : vector<256x128xf32>
    %54 = tpu.matmul %53, %37, %cst_32 {dimension_numbers = #tpu.dot_dimension_numbers<[1], [0], [0], [1], [0, 0, 1, 1], [], []>} : vector<256x128xbf16>, vector<128x128xbf16>, vector<256x128xf32> -> vector<256x128xf32>
    %55 = vector.shape_cast %43 : vector<128xf32> to vector<1x128xf32>
    %56 = vector.broadcast %55 : vector<1x128xf32> to vector<256x128xf32>
    %57 = arith.addf %54, %56 : vector<256x128xf32>
    %cst_33 = arith.constant 0.000000e+00 : f32
    %58 = vector.broadcast %cst_33 : f32 to vector<256x128xf32>
    %59 = arith.maximumf %57, %58 : vector<256x128xf32>
    %60 = arith.truncf %59 : vector<256x128xf32> to vector<256x128xbf16>
    %cst_34 = arith.constant dense<0.000000e+00> : vector<256x128xf32>
    %61 = tpu.matmul %60, %39, %cst_34 {dimension_numbers = #tpu.dot_dimension_numbers<[1], [0], [0], [1], [0, 0, 1, 1], [], []>} : vector<256x128xbf16>, vector<128x128xbf16>, vector<256x128xf32> -> vector<256x128xf32>
    %62 = vector.shape_cast %45 : vector<128xf32> to vector<1x128xf32>
    %63 = vector.broadcast %62 : vector<1x128xf32> to vector<256x128xf32>
    %64 = arith.addf %61, %63 : vector<256x128xf32>
    %65 = arith.addf %33, %64 : vector<256x128xf32>
    %cst_35 = arith.constant dense<0.000000e+00> : vector<256xf32>
    %66 = vector.multi_reduction <add>, %65, %cst_35 [1] : vector<256x128xf32> to vector<256xf32>
    %67 = vector.shape_cast %66 : vector<256xf32> to vector<256x1xf32>
    %cst_36 = arith.constant 1.280000e+02 : f32
    %68 = vector.broadcast %cst_36 : f32 to vector<256x1xf32>
    %69 = arith.divf %67, %68 : vector<256x1xf32>
    %70 = vector.broadcast %69 : vector<256x1xf32> to vector<256x128xf32>
    %71 = arith.subf %65, %70 : vector<256x128xf32>
    %72 = arith.mulf %71, %71 : vector<256x128xf32>
    %cst_37 = arith.constant dense<0.000000e+00> : vector<256xf32>
    %73 = vector.multi_reduction <add>, %72, %cst_37 [1] : vector<256x128xf32> to vector<256xf32>
    %74 = vector.shape_cast %73 : vector<256xf32> to vector<256x1xf32>
    %cst_38 = arith.constant 1.280000e+02 : f32
    %75 = vector.broadcast %cst_38 : f32 to vector<256x1xf32>
    %76 = arith.divf %74, %75 : vector<256x1xf32>
    %cst_39 = arith.constant 9.99999974E-6 : f32
    %77 = vector.broadcast %cst_39 : f32 to vector<256x1xf32>
    %78 = arith.addf %76, %77 : vector<256x1xf32>
    %79 = math.rsqrt %78 : vector<256x1xf32>
    %80 = vector.broadcast %79 : vector<256x1xf32> to vector<256x128xf32>
    %81 = arith.mulf %71, %80 : vector<256x128xf32>
    %c0_40 = arith.constant 0 : index
    %c0_41 = arith.constant 0 : index
    %82 = vector.load %arg4[%c0_40, %c0_41] : memref<1x128xf32, #tpu.memory_space<vmem>>, vector<1x128xf32>
    %83 = vector.broadcast %82 : vector<1x128xf32> to vector<256x128xf32>
    %84 = arith.mulf %81, %83 : vector<256x128xf32>
    %c0_42 = arith.constant 0 : index
    %c0_43 = arith.constant 0 : index
    %85 = vector.load %arg5[%c0_42, %c0_43] : memref<1x128xf32, #tpu.memory_space<vmem>>, vector<1x128xf32>
    %86 = vector.broadcast %85 : vector<1x128xf32> to vector<256x128xf32>
    %87 = arith.addf %84, %86 : vector<256x128xf32>
    %88 = arith.truncf %87 : vector<256x128xf32> to vector<256x128xbf16>
    %c0_44 = arith.constant 0 : index
    %c0_45 = arith.constant 0 : index
    %89 = vector.load %arg6[%c0_44, %c0_45] : memref<256x128xbf16, #tpu.memory_space<vmem>>, vector<256x128xbf16>
    tpu.vector_store %arg6[%c0_44, %c0_45], %88 {strides = array<i32>} : memref<256x128xbf16, #tpu.memory_space<vmem>>, vector<256x128xbf16>,
    return
  }
  func.func @transform_0(%arg0: i32) -> (i32, i32) {
    %c0_i32 = arith.constant 0 : i32
    %c0_i32_0 = arith.constant 0 : i32
    return %arg0, %c0_i32 : i32, i32
  }
  func.func @transform_1(%arg0: i32) -> (i32, i32, i32) {
    %c0_i32 = arith.constant 0 : i32
    %c0_i32_0 = arith.constant 0 : i32
    %c0_i32_1 = arith.constant 0 : i32
    %c0_i32_2 = arith.constant 0 : i32
    return %c0_i32, %c0_i32_0, %c0_i32_1 : i32, i32, i32
  }
  func.func @transform_2(%arg0: i32) -> (i32, i32) {
    %c0_i32 = arith.constant 0 : i32
    %c0_i32_0 = arith.constant 0 : i32
    %c0_i32_1 = arith.constant 0 : i32
    return %c0_i32, %c0_i32_0 : i32, i32
  }
  func.func @transform_3(%arg0: i32) -> (i32, i32) {
    %c0_i32 = arith.constant 0 : i32
    %c0_i32_0 = arith.constant 0 : i32
    %c0_i32_1 = arith.constant 0 : i32
    return %c0_i32, %c0_i32_0 : i32, i32
  }
  func.func @transform_4(%arg0: i32) -> (i32, i32) {
    %c0_i32 = arith.constant 0 : i32
    %c0_i32_0 = arith.constant 0 : i32
    %c0_i32_1 = arith.constant 0 : i32
    return %c0_i32, %c0_i32_0 : i32, i32
  }
  func.func @transform_5(%arg0: i32) -> (i32, i32) {
    %c0_i32 = arith.constant 0 : i32
    %c0_i32_0 = arith.constant 0 : i32
    return %arg0, %c0_i32 : i32, i32
  }
}

</mosaic_0001>

<llo_original>
// kernel: tpu_custom_call.1
$region0: #{tpu_custom_call.1}
  #allocation0 [shape = 'u32[]', space=smem, size = 0x4, offset = 0x4, fixed_abs, tag = 'smem constant byte address 0x4 - core index']
  #allocation1 [shape = 'u32[144,128]{1,0:T(1,128)}', space=vmem, size = 0x12000, scoped, tag = 'internal scratch']
  %s0 = inlined_call_operand.hbm [shape: bf16[512,128], index: 0, kind: input, shape index: {}]
  %s1 = inlined_call_operand.hbm [shape: bf16[6,128,128], index: 1, kind: input, shape index: {}]
  %s2 = inlined_call_operand.hbm [shape: f32[6,128], index: 2, kind: input, shape index: {}]
  %s3 = inlined_call_operand.vmem [shape: f32[1,128], index: 3, kind: input, shape index: {}]
  %s4 = inlined_call_operand.vmem [shape: f32[1,128], index: 4, kind: input, shape index: {}]
  %s5 = inlined_call_operand.hbm [shape: bf16[512,128], index: 5, kind: output, shape index: {}]
  %s6 = sld [smem:[#allocation0]]
  $region65: #{tpu_custom_call.1} parent=0
    _
  %s8 = ssub.s32 1, %s6
  %s9 = scalar_select 0, %s8, %s6
  $region1: #{tpu_custom_call.1} parent=0
    #allocation2 [shape = 'u8[131072]{0}', space=vmem, size = 0x20000, scoped, tag = 'input window, operand 0']
    #allocation3 [shape = 's32[2]{0}', space=sflag, size = 0x8, scoped, tag = 'scoped memory for tpu_custom_call.1']
    #allocation4 [shape = 's32[2]{0}', space=sflag, size = 0x8, scoped, tag = 'scoped memory for tpu_custom_call.1']
    #allocation5 [shape = 'u8[196608]{0}', space=vmem, size = 0x30000, scoped, tag = 'input window, operand 1, single buffered']
    #allocation6 [shape = 's32[1]{0}', space=sflag, size = 0x4, scoped, tag = 'scoped memory for tpu_custom_call.1']
    #allocation7 [shape = 'u8[4096]{0}', space=vmem, size = 0x1000, scoped, tag = 'input window, operand 2, single buffered']
    #allocation8 [shape = 'u8[131072]{0}', space=vmem, size = 0x20000, scoped, tag = 'output window, operand 0']
    %10 = vsyncpa [#allocation3], 0
    %s11 = scalar_lea.sflag [#allocation3], 1
    %12 = vsyncpa %s11, 0
    %13 = vsyncpa [#allocation6], 0
    %14 = vsyncpa [#allocation4], 0
    %s15 = scalar_lea.sflag [#allocation4], 1
    %16 = vsyncpa %s15, 0
    loop: start=0, step=1, limit=4
    $region2: #{tpu_custom_call.1} parent=1 // loop_pre_header
      _
    $region3: #{tpu_custom_call.1} parent=1 // loop_header
      %s18 = sphi 0, %s22
      %p19 = scmp.ge.s32.totalorder %s18, 4
      %s28 = sphi 0, %s30
      %s31 = sphi 0, %s28
      %s32 = sphi 0, %s31
      %s48 = sphi 0, %s32
      %s52 = sphi 0, %s52
      %s54 = sphi 0, %s52
      %s55 = sphi 0, %s54
      %s69 = sphi 0, %s55
      %s73 = sphi 0, %s73
      %s75 = sphi 0, %s73
      %s76 = sphi 0, %s75
      %s90 = sphi 0, %s76
      %s94 = sphi 0, %s94
      %s96 = sphi 0, %s94
      %s97 = sphi 0, %s96
      %s111 = sphi 0, %s97
      %s115 = sphi 0, %s115
      %s117 = sphi 0, %s115
      %s118 = sphi 0, %s117
      %s132 = sphi 0, %s118
      %s138 = sphi 0, %s140
      %s141 = sphi 0, %s138
      %s142 = sphi 0, %s141
      %s158 = sphi 0, %s142
    $region4: #{tpu_custom_call.1} parent=1 // loop_header_branch
      %21 = sbr.rel (%p19) target = $region8
    $region5: #{tpu_custom_call.1} parent=1 // loop_body
      %s23 = ssub.s32 %s18, 1
      %s24 = ssub.s32 %s18, 2
      %s25 = sadd.s32 %s18, 1
      %s26 = ssub.s32 %s18, %s25
      %p27 = scmp.eq.s32.totalorder %s26, 0
      %s29 = sadd.s32 %s28, 1
      %s30 = scalar_select %p27, %s28, %s29
      %p33 = pneg %p27
      %p34 = scmp.eq.s32.totalorder %s18, 1
      %p35 = por %p33, %p34
      %p36 = scmp.ne.s32.totalorder %s28, %s31
      %p37 = scmp.eq.s32.totalorder %s18, 0
      %p38 = por %p36, %p37
      %p39 = scmp.ne.s32.totalorder %s28, %s31
      %p40 = scmp.eq.s32.totalorder %s23, 1
      %p41 = por %p39, %p40
      %p42 = scmp.ne.s32.totalorder %s31, %s32
      %p43 = scmp.eq.s32.totalorder %s23, 0
      %p44 = por %p42, %p43
      %p45 = scmp.ne.s32.totalorder %s31, %s32
      %p46 = scmp.eq.s32.totalorder %s24, 1
      %p47 = por %p45, %p46
      %p49 = scmp.ne.s32.totalorder %s32, %s48
      %p50 = scmp.eq.s32.totalorder %s24, 0
      %p51 = por %p49, %p50
      %s53 = sadd.s32 %s52, 1
      %p56 = scmp.eq.s32.totalorder %s18, 1
      %p57 = scmp.ne.s32.totalorder %s52, %s54
      %p58 = scmp.eq.s32.totalorder %s18, 0
      %p59 = por %p57, %p58
      %p60 = scmp.ne.s32.totalorder %s52, %s54
      %p61 = scmp.eq.s32.totalorder %s23, 1
      %p62 = por %p60, %p61
      %p63 = scmp.ne.s32.totalorder %s54, %s55
      %p64 = scmp.eq.s32.totalorder %s23, 0
      %p65 = por %p63, %p64
      %p66 = scmp.ne.s32.totalorder %s54, %s55
      %p67 = scmp.eq.s32.totalorder %s24, 1
      %p68 = por %p66, %p67
      %p70 = scmp.ne.s32.totalorder %s55, %s69
      %p71 = scmp.eq.s32.totalorder %s24, 0
      %p72 = por %p70, %p71
      %s74 = sadd.s32 %s73, 1
      %p77 = scmp.eq.s32.totalorder %s18, 1
      %p78 = scmp.ne.s32.totalorder %s73, %s75
      %p79 = scmp.eq.s32.totalorder %s18, 0
      %p80 = por %p78, %p79
      %p81 = scmp.ne.s32.totalorder %s73, %s75
      %p82 = scmp.eq.s32.totalorder %s23, 1
      %p83 = por %p81, %p82
      %p84 = scmp.ne.s32.totalorder %s75, %s76
      %p85 = scmp.eq.s32.totalorder %s23, 0
      %p86 = por %p84, %p85
      %p87 = scmp.ne.s32.totalorder %s75, %s76
      %p88 = scmp.eq.s32.totalorder %s24, 1
      %p89 = por %p87, %p88
      %p91 = scmp.ne.s32.totalorder %s76, %s90
      %p92 = scmp.eq.s32.totalorder %s24, 0
      %p93 = por %p91, %p92
      %s95 = sadd.s32 %s94, 1
      %p98 = scmp.eq.s32.totalorder %s18, 1
      %p99 = scmp.ne.s32.totalorder %s94, %s96
      %p100 = scmp.eq.s32.totalorder %s18, 0
      %p101 = por %p99, %p100
      %p102 = scmp.ne.s32.totalorder %s94, %s96
      %p103 = scmp.eq.s32.totalorder %s23, 1
      %p104 = por %p102, %p103
      %p105 = scmp.ne.s32.totalorder %s96, %s97
      %p106 = scmp.eq.s32.totalorder %s23, 0
      %p107 = por %p105, %p106
      %p108 = scmp.ne.s32.totalorder %s96, %s97
      %p109 = scmp.eq.s32.totalorder %s24, 1
      %p110 = por %p108, %p109
      %p112 = scmp.ne.s32.totalorder %s97, %s111
      %p113 = scmp.eq.s32.totalorder %s24, 0
      %p114 = por %p112, %p113
      %s116 = sadd.s32 %s115, 1
      %p119 = scmp.eq.s32.totalorder %s18, 1
      %p120 = scmp.ne.s32.totalorder %s115, %s117
      %p121 = scmp.eq.s32.totalorder %s18, 0
      %p122 = por %p120, %p121
      %p123 = scmp.ne.s32.totalorder %s115, %s117
      %p124 = scmp.eq.s32.totalorder %s23, 1
      %p125 = por %p123, %p124
      %p126 = scmp.ne.s32.totalorder %s117, %s118
      %p127 = scmp.eq.s32.totalorder %s23, 0
      %p128 = por %p126, %p127
      %p129 = scmp.ne.s32.totalorder %s117, %s118
      %p130 = scmp.eq.s32.totalorder %s24, 1
      %p131 = por %p129, %p130
      %p133 = scmp.ne.s32.totalorder %s118, %s132
      %p134 = scmp.eq.s32.totalorder %s24, 0
      %p135 = por %p133, %p134
      %s136 = ssub.s32 %s18, %s25
      %p137 = scmp.eq.s32.totalorder %s136, 0
      %s139 = sadd.s32 %s138, 1
      %s140 = scalar_select %p137, %s138, %s139
      %p143 = pneg %p137
      %p144 = scmp.eq.s32.totalorder %s18, 1
      %p145 = por %p143, %p144
      %p146 = scmp.ne.s32.totalorder %s138, %s141
      %p147 = scmp.eq.s32.totalorder %s18, 0
      %p148 = por %p146, %p147
      %p149 = scmp.ne.s32.totalorder %s138, %s141
      %p150 = scmp.eq.s32.totalorder %s23, 1
      %p151 = por %p149, %p150
      %p152 = scmp.ne.s32.totalorder %s141, %s142
      %p153 = scmp.eq.s32.totalorder %s23, 0
      %p154 = por %p152, %p153
      %p155 = scmp.ne.s32.totalorder %s141, %s142
      %p156 = scmp.eq.s32.totalorder %s24, 1
      %p157 = por %p155, %p156
      %p159 = scmp.ne.s32.totalorder %s142, %s158
      %p160 = scmp.eq.s32.totalorder %s24, 0
      %p161 = por %p159, %p160
      %p162 = scmp.le.s32.totalorder 1, %s18
      %p163 = scmp.lt.s32.totalorder %s18, 3
      %p164 = pnand %p162, %p163
      %p165 = pneg %p164
      // Predicated region
      $region9: #{tpu_custom_call.1} parent=5 // pred_check
        _
      $region10: #{tpu_custom_call.1} parent=5 // pred_check_branch
        %167 = sbr.rel (%p164) target = $region12
      $region11: #{tpu_custom_call.1} parent=5 // pred_region
        %s168 = ssub.s32 %s18, 1
        // Predicated region
        $region13: #{tpu_custom_call.1} parent=11 // pred_check
          %p169 = pneg %p65
        $region14: #{tpu_custom_call.1} parent=11 // pred_check_branch
          %171 = sbr.rel (%p169) target = $region16
        $region15: #{tpu_custom_call.1} parent=11 // pred_region
          %s173 = ssub.s32 6144, 6144
          %174 = vsyncadd [#allocation6], %s173
          %s175 = sshll.u32 [#allocation5], 4
          %s176 = int_to_ptr.vmem [resolvable:$true] %s175
          %181 = dma.hbm_to_vmem [thread:$0]  %s1, 6144, %s176, [#allocation6], 64, 64, 4
        $region16: #{tpu_custom_call.1} parent=11 // pred_fallthru
          _
        // Predicated region
        $region17: #{tpu_custom_call.1} parent=11 // pred_check
          %p182 = pneg %p86
        $region18: #{tpu_custom_call.1} parent=11 // pred_check_branch
          %184 = sbr.rel (%p182) target = $region20
        $region19: #{tpu_custom_call.1} parent=11 // pred_region
          %s186 = ssub.s32 128, 128
          %187 = vsyncadd [#allocation6], %s186
          %s189 = sshll.u32 [#allocation7], 4
          %s190 = int_to_ptr.vmem [resolvable:$true] %s189
          %192 = dma.hbm_to_vmem [thread:$0]  %s2, 128, %s190, [#allocation6]
        $region20: #{tpu_custom_call.1} parent=11 // pred_fallthru
          _
        // Predicated region
        $region21: #{tpu_custom_call.1} parent=11 // pred_check
          %p193 = pneg %p107
        $region22: #{tpu_custom_call.1} parent=11 // pred_check_branch
          %195 = sbr.rel (%p193) target = $region24
        $region23: #{tpu_custom_call.1} parent=11 // pred_region
          _
        $region24: #{tpu_custom_call.1} parent=11 // pred_fallthru
          _
        // Predicated region
        $region25: #{tpu_custom_call.1} parent=11 // pred_check
          %p196 = pneg %p128
        $region26: #{tpu_custom_call.1} parent=11 // pred_check_branch
          %198 = sbr.rel (%p196) target = $region28
        $region27: #{tpu_custom_call.1} parent=11 // pred_region
          _
        $region28: #{tpu_custom_call.1} parent=11 // pred_fallthru
          _
      $region12: #{tpu_custom_call.1} parent=5 // pred_fallthru
        _
      %p199 = scmp.lt.s32.totalorder %s18, 2
      // Predicated region
      $region29: #{tpu_custom_call.1} parent=5 // pred_check
        %p200 = pneg %p199
      $region30: #{tpu_custom_call.1} parent=5 // pred_check_branch
        %202 = sbr.rel (%p200) target = $region32
      $region31: #{tpu_custom_call.1} parent=5 // pred_region
        // Predicated region
        $region33: #{tpu_custom_call.1} parent=31 // pred_check
          %p203 = pneg %p38
        $region34: #{tpu_custom_call.1} parent=31 // pred_check_branch
          %205 = sbr.rel (%p203) target = $region36
        $region35: #{tpu_custom_call.1} parent=31 // pred_region
          %s206 = sand.u32 %s28, 1
          %s207 = scalar_lea.sflag [#allocation3], %s206
          %s208 = sand.u32 %s28, 1
          %s209 = smul.addr %s208, 128
          %s210 = scalar_lea.vmem [#allocation2], %s209
          %s211 = smul.u32 32, %s18
          %s213 = ssub.s32 2048, 2048
          %214 = vsyncadd %s207, %s213
          %s215 = smul.addr %s211, 64
          %s216 = scalar_lea.hbm %s0, %s215
          %s217 = sshll.u32 %s210, 4
          %s218 = int_to_ptr.vmem [resolvable:$true] %s217
          %223 = dma.hbm_to_vmem [thread:$0]  %s216, 2048, %s218, %s207, 64, 64, 4
        $region36: #{tpu_custom_call.1} parent=31 // pred_fallthru
          _
      $region32: #{tpu_custom_call.1} parent=5 // pred_fallthru
        _
      %p224 = scmp.le.s32.totalorder 1, %s18
      %p225 = scmp.lt.s32.totalorder %s18, 3
      %p226 = pnand %p224, %p225
      %p227 = pneg %p226
      // Predicated region
      $region37: #{tpu_custom_call.1} parent=5 // pred_check
        _
      $region38: #{tpu_custom_call.1} parent=5 // pred_check_branch
        %229 = sbr.rel (%p226) target = $region40
      $region39: #{tpu_custom_call.1} parent=5 // pred_region
        %s230 = ssub.s32 %s18, 1
        %s231 = sand.u32 %s31, 1
        %s232 = scalar_lea.sflag [#allocation3], %s231
        %s233 = sand.u32 %s31, 1
        %s234 = smul.addr %s233, 128
        %s235 = scalar_lea.vmem [#allocation2], %s234
        // Predicated region
        $region41: #{tpu_custom_call.1} parent=39 // pred_check
          %p236 = pneg %p44
        $region42: #{tpu_custom_call.1} parent=39 // pred_check_branch
          %238 = sbr.rel (%p236) target = $region44
        $region43: #{tpu_custom_call.1} parent=39 // pred_region
          %239 = dma.done %s232, 2048
        $region44: #{tpu_custom_call.1} parent=39 // pred_fallthru
          _
        // Predicated region
        $region45: #{tpu_custom_call.1} parent=39 // pred_check
          %p240 = pneg %p65
        $region46: #{tpu_custom_call.1} parent=39 // pred_check_branch
          %242 = sbr.rel (%p240) target = $region48
        $region47: #{tpu_custom_call.1} parent=39 // pred_region
          %243 = dma.done [#allocation6], 6144
        $region48: #{tpu_custom_call.1} parent=39 // pred_fallthru
          _
        // Predicated region
        $region49: #{tpu_custom_call.1} parent=39 // pred_check
          %p244 = pneg %p86
        $region50: #{tpu_custom_call.1} parent=39 // pred_check_branch
          %246 = sbr.rel (%p244) target = $region52
        $region51: #{tpu_custom_call.1} parent=39 // pred_region
          %247 = dma.done [#allocation6], 128
        $region52: #{tpu_custom_call.1} parent=39 // pred_fallthru
          _
        %s248 = sand.u32 %s31, 1
        %s249 = scalar_lea.sflag [#allocation3], %s248
        %s250 = sand.u32 %s31, 1
        %s251 = smul.addr %s250, 128
        %s252 = scalar_lea.vmem [#allocation2], %s251
        %p253 = pneg %p44
        %p254 = pneg %p41
        %p255 = pneg %p65
        %p256 = pneg %p62
        %p257 = pneg %p86
        %p258 = pneg %p83
        %p259 = pneg %p107
        %p260 = pneg %p104
        %p261 = pneg %p128
        %p262 = pneg %p125
        %p263 = pneg %p154
        %p264 = pneg %p151
        %s265 = sand.u32 %s141, 1
        %s266 = scalar_lea.sflag [#allocation4], %s265
        %s267 = sand.u32 %s141, 1
        %s268 = smul.addr %s267, 128
        %s269 = scalar_lea.vmem [#allocation8], %s268
        %s270 = smul.u32 32, %s23
        %s271 = smul.u32 32, %s23
        %v273 = vld [vmem:[%s235] sm:$0xf]
        %v274 = vld [vmem:[%s235 + $0x4] sm:$0xf]
        %v275 = vld [vmem:[%s235 + $0x8] sm:$0xf]
        %v276 = vld [vmem:[%s235 + $0xc] sm:$0xf]
        %v277 = vld [vmem:[%s235 + $0x10] sm:$0xf]
        %v278 = vld [vmem:[%s235 + $0x14] sm:$0xf]
        %v279 = vld [vmem:[%s235 + $0x18] sm:$0xf]
        %v280 = vld [vmem:[%s235 + $0x1c] sm:$0xf]
        %v281 = vld [vmem:[%s235 + $0x20] sm:$0xf]
        %v282 = vld [vmem:[%s235 + $0x24] sm:$0xf]
        %v283 = vld [vmem:[%s235 + $0x28] sm:$0xf]
        %v284 = vld [vmem:[%s235 + $0x2c] sm:$0xf]
        %v285 = vld [vmem:[%s235 + $0x30] sm:$0xf]
        %v286 = vld [vmem:[%s235 + $0x34] sm:$0xf]
        %v287 = vld [vmem:[%s235 + $0x38] sm:$0xf]
        %v288 = vld [vmem:[%s235 + $0x3c] sm:$0xf]
        %v289 = vld [vmem:[%s235 + $0x40] sm:$0xf]
        %v290 = vld [vmem:[%s235 + $0x44] sm:$0xf]
        %v291 = vld [vmem:[%s235 + $0x48] sm:$0xf]
        %v292 = vld [vmem:[%s235 + $0x4c] sm:$0xf]
        %v293 = vld [vmem:[%s235 + $0x50] sm:$0xf]
        %v294 = vld [vmem:[%s235 + $0x54] sm:$0xf]
        %v295 = vld [vmem:[%s235 + $0x58] sm:$0xf]
        %v296 = vld [vmem:[%s235 + $0x5c] sm:$0xf]
        %v297 = vld [vmem:[%s235 + $0x60] sm:$0xf]
        %v298 = vld [vmem:[%s235 + $0x64] sm:$0xf]
        %v299 = vld [vmem:[%s235 + $0x68] sm:$0xf]
        %v300 = vld [vmem:[%s235 + $0x6c] sm:$0xf]
        %v301 = vld [vmem:[%s235 + $0x70] sm:$0xf]
        %v302 = vld [vmem:[%s235 + $0x74] sm:$0xf]
        %v303 = vld [vmem:[%s235 + $0x78] sm:$0xf]
        %v304 = vld [vmem:[%s235 + $0x7c] sm:$0xf]
        %v305 = vunpack.c.l.bf16 %v273
        %v306 = vunpack.c.l.bf16 %v274
        %v307 = vunpack.c.l.bf16 %v275
        %v308 = vunpack.c.l.bf16 %v276
        %v309 = vunpack.c.l.bf16 %v277
        %v310 = vunpack.c.l.bf16 %v278
        %v311 = vunpack.c.l.bf16 %v279
        %v312 = vunpack.c.l.bf16 %v280
        %v313 = vunpack.c.l.bf16 %v281
        %v314 = vunpack.c.l.bf16 %v282
        %v315 = vunpack.c.l.bf16 %v283
        %v316 = vunpack.c.l.bf16 %v284
        %v317 = vunpack.c.l.bf16 %v285
        %v318 = vunpack.c.l.bf16 %v286
        %v319 = vunpack.c.l.bf16 %v287
        %v320 = vunpack.c.l.bf16 %v288
        %v321 = vunpack.c.l.bf16 %v289
        %v322 = vunpack.c.l.bf16 %v290
        %v323 = vunpack.c.l.bf16 %v291
        %v324 = vunpack.c.l.bf16 %v292
        %v325 = vunpack.c.l.bf16 %v293
        %v326 = vunpack.c.l.bf16 %v294
        %v327 = vunpack.c.l.bf16 %v295
        %v328 = vunpack.c.l.bf16 %v296
        %v329 = vunpack.c.l.bf16 %v297
        %v330 = vunpack.c.l.bf16 %v298
        %v331 = vunpack.c.l.bf16 %v299
        %v332 = vunpack.c.l.bf16 %v300
        %v333 = vunpack.c.l.bf16 %v301
        %v334 = vunpack.c.l.bf16 %v302
        %v335 = vunpack.c.l.bf16 %v303
        %v336 = vunpack.c.l.bf16 %v304
        %v337 = vld [vmem:[#allocation5] sm:$0xf]
        %v338 = vld [vmem:[#allocation5 + $0x4] sm:$0xf]
        %v339 = vld [vmem:[#allocation5 + $0x8] sm:$0xf]
        %v340 = vld [vmem:[#allocation5 + $0xc] sm:$0xf]
        %v341 = vld [vmem:[#allocation5 + $0x10] sm:$0xf]
        %v342 = vld [vmem:[#allocation5 + $0x14] sm:$0xf]
        %v343 = vld [vmem:[#allocation5 + $0x18] sm:$0xf]
        %v344 = vld [vmem:[#allocation5 + $0x1c] sm:$0xf]
        %v345 = vld [vmem:[#allocation5 + $0x20] sm:$0xf]
        %v346 = vld [vmem:[#allocation5 + $0x24] sm:$0xf]
        %v347 = vld [vmem:[#allocation5 + $0x28] sm:$0xf]
        %v348 = vld [vmem:[#allocation5 + $0x2c] sm:$0xf]
        %v349 = vld [vmem:[#allocation5 + $0x30] sm:$0xf]
        %v350 = vld [vmem:[#allocation5 + $0x34] sm:$0xf]
        %v351 = vld [vmem:[#allocation5 + $0x38] sm:$0xf]
        %v352 = vld [vmem:[#allocation5 + $0x3c] sm:$0xf]
        %s353 = scalar_lea.vmem [#allocation5], 64
        %v354 = vld [vmem:[%s353] sm:$0xf]
        %v355 = vld [vmem:[%s353 + $0x4] sm:$0xf]
        %v356 = vld [vmem:[%s353 + $0x8] sm:$0xf]
        %v357 = vld [vmem:[%s353 + $0xc] sm:$0xf]
        %v358 = vld [vmem:[%s353 + $0x10] sm:$0xf]
        %v359 = vld [vmem:[%s353 + $0x14] sm:$0xf]
        %v360 = vld [vmem:[%s353 + $0x18] sm:$0xf]
        %v361 = vld [vmem:[%s353 + $0x1c] sm:$0xf]
        %v362 = vld [vmem:[%s353 + $0x20] sm:$0xf]
        %v363 = vld [vmem:[%s353 + $0x24] sm:$0xf]
        %v364 = vld [vmem:[%s353 + $0x28] sm:$0xf]
        %v365 = vld [vmem:[%s353 + $0x2c] sm:$0xf]
        %v366 = vld [vmem:[%s353 + $0x30] sm:$0xf]
        %v367 = vld [vmem:[%s353 + $0x34] sm:$0xf]
        %v368 = vld [vmem:[%s353 + $0x38] sm:$0xf]
        %v369 = vld [vmem:[%s353 + $0x3c] sm:$0xf]
        %s370 = scalar_lea.vmem [#allocation5], 128
        %v371 = vld [vmem:[%s370] sm:$0xf]
        %v372 = vld [vmem:[%s370 + $0x4] sm:$0xf]
        %v373 = vld [vmem:[%s370 + $0x8] sm:$0xf]
        %v374 = vld [vmem:[%s370 + $0xc] sm:$0xf]
        %v375 = vld [vmem:[%s370 + $0x10] sm:$0xf]
        %v376 = vld [vmem:[%s370 + $0x14] sm:$0xf]
        %v377 = vld [vmem:[%s370 + $0x18] sm:$0xf]
        %v378 = vld [vmem:[%s370 + $0x1c] sm:$0xf]
        %v379 = vld [vmem:[%s370 + $0x20] sm:$0xf]
        %v380 = vld [vmem:[%s370 + $0x24] sm:$0xf]
        %v381 = vld [vmem:[%s370 + $0x28] sm:$0xf]
        %v382 = vld [vmem:[%s370 + $0x2c] sm:$0xf]
        %v383 = vld [vmem:[%s370 + $0x30] sm:$0xf]
        %v384 = vld [vmem:[%s370 + $0x34] sm:$0xf]
        %v385 = vld [vmem:[%s370 + $0x38] sm:$0xf]
        %v386 = vld [vmem:[%s370 + $0x3c] sm:$0xf]
        %v387 = vld [vmem:[#allocation7] sm:$0x1]
        %v388 = vld [vmem:[#allocation7 + $0x1] sm:$0x1]
        %v389 = vld [vmem:[#allocation7 + $0x2] sm:$0x1]
        %v390 = vlaneseq
        %v391 = vshrl.u32 %v390, 7
        %v392 = vsub.s32 0, %v391
        %v393 = vrot.slane %v387, %v392
        %v426 = vunpack.c.l.b16 %v273
        %v427 = vunpack.c.l.b16 %v274
        %v428 = vunpack.c.l.b16 %v275
        %v429 = vunpack.c.l.b16 %v276
        %v430 = vunpack.c.l.b16 %v277
        %v431 = vunpack.c.l.b16 %v278
        %v432 = vunpack.c.l.b16 %v279
        %v433 = vunpack.c.l.b16 %v280
        %v434 = vunpack.c.l.b16 %v281
        %v435 = vunpack.c.l.b16 %v282
        %v436 = vunpack.c.l.b16 %v283
        %v437 = vunpack.c.l.b16 %v284
        %v438 = vunpack.c.l.b16 %v285
        %v439 = vunpack.c.l.b16 %v286
        %v440 = vunpack.c.l.b16 %v287
        %v441 = vunpack.c.l.b16 %v288
        %v442 = vunpack.c.l.b16 %v289
        %v443 = vunpack.c.l.b16 %v290
        %v444 = vunpack.c.l.b16 %v291
        %v445 = vunpack.c.l.b16 %v292
        %v446 = vunpack.c.l.b16 %v293
        %v447 = vunpack.c.l.b16 %v294
        %v448 = vunpack.c.l.b16 %v295
        %v449 = vunpack.c.l.b16 %v296
        %v450 = vunpack.c.l.b16 %v297
        %v451 = vunpack.c.l.b16 %v298
        %v452 = vunpack.c.l.b16 %v299
        %v453 = vunpack.c.l.b16 %v300
        %v454 = vunpack.c.l.b16 %v301
        %v455 = vunpack.c.l.b16 %v302
        %v456 = vunpack.c.l.b16 %v303
        %v457 = vunpack.c.l.b16 %v304
        %v458 = vpack.c.b16 %v427, %v426
        %v459 = vpack.c.b16 %v429, %v428
        %v460 = vpack.c.b16 %v431, %v430
        %v461 = vpack.c.b16 %v433, %v432
        %v462 = vpack.c.b16 %v435, %v434
        %v463 = vpack.c.b16 %v437, %v436
        %v464 = vpack.c.b16 %v439, %v438
        %v465 = vpack.c.b16 %v441, %v440
        %v466 = vpack.c.b16 %v443, %v442
        %v467 = vpack.c.b16 %v445, %v444
        %v468 = vpack.c.b16 %v447, %v446
        %v469 = vpack.c.b16 %v449, %v448
        %v470 = vpack.c.b16 %v451, %v450
        %v471 = vpack.c.b16 %v453, %v452
        %v472 = vpack.c.b16 %v455, %v454
        %v473 = vpack.c.b16 %v457, %v456
        %v506 = vunpack.c.l.b16 %v337
        %v507 = vunpack.c.l.b16 %v338
        %v508 = vunpack.c.l.b16 %v339
        %v509 = vunpack.c.l.b16 %v340
        %v510 = vunpack.c.l.b16 %v341
        %v511 = vunpack.c.l.b16 %v342
        %v512 = vunpack.c.l.b16 %v343
        %v513 = vunpack.c.l.b16 %v344
        %v514 = vunpack.c.l.b16 %v345
        %v515 = vunpack.c.l.b16 %v346
        %v516 = vunpack.c.l.b16 %v347
        %v517 = vunpack.c.l.b16 %v348
        %v518 = vunpack.c.l.b16 %v349
        %v519 = vunpack.c.l.b16 %v350
        %v520 = vunpack.c.l.b16 %v351
        %v521 = vunpack.c.l.b16 %v352
        %v522 = vpack.c.b16 %v507, %v506
        %v523 = vpack.c.b16 %v509, %v508
        %v524 = vpack.c.b16 %v511, %v510
        %v525 = vpack.c.b16 %v513, %v512
        %v526 = vpack.c.b16 %v515, %v514
        %v527 = vpack.c.b16 %v517, %v516
        %v528 = vpack.c.b16 %v519, %v518
        %v529 = vpack.c.b16 %v521, %v520
        %538 = vmatprep.subr.bf16.mxu0 0
        %539 = vmatpush1.bf16.msra.mxu0 %v522
        %540 = vmatprep.subr.bf16.mxu0 0
        %541 = vmatpush1.bf16.msra.mxu0 %v523
        %542 = vmatprep.subr.bf16.mxu0 0
        %543 = vmatpush1.bf16.msra.mxu0 %v524
        %544 = vmatprep.subr.bf16.mxu0 0
        %545 = vmatpush1.bf16.msra.mxu0 %v525
        %546 = vmatprep.subr.bf16.mxu0 0
        %547 = vmatpush1.bf16.msra.mxu0 %v526
        %548 = vmatprep.subr.bf16.mxu0 0
        %549 = vmatpush1.bf16.msra.mxu0 %v527
        %550 = vmatprep.subr.bf16.mxu0 0
        %551 = vmatpush1.bf16.msra.mxu0 %v528
        %552 = vmatprep.subr.bf16.mxu0 0
        %553 = vmatpush1.bf16.msra.mxu0 %v529
        %554 = vmatprep.subr.bf16.mxu0 0
        %555 = vmatpush1.bf16.msra.mxu0 0
        %556 = vmatprep.subr.bf16.mxu0 0
        %557 = vmatpush1.bf16.msra.mxu0 0
        %558 = vmatprep.subr.bf16.mxu0 0
        %559 = vmatpush1.bf16.msra.mxu0 0
        %560 = vmatprep.subr.bf16.mxu0 0
        %561 = vmatpush1.bf16.msra.mxu0 0
        %562 = vmatprep.subr.bf16.mxu0 0
        %563 = vmatpush1.bf16.msra.mxu0 0
        %564 = vmatprep.subr.bf16.mxu0 0
        %565 = vmatpush1.bf16.msra.mxu0 0
        %566 = vmatprep.subr.bf16.mxu0 0
        %567 = vmatpush1.bf16.msra.mxu0 0
        %568 = vmatprep.subr.bf16.mxu0 0
        %569 = vmatpush1.bf16.msra.mxu0 0
        %570 = vmatprep.mubr.bf16.mxu0 0
        %571 = vmatmul.mubr.bf16.gmra.mrb[0].mxu0 %v458
        %v572 = vpop.f32.mrb[0].mxu0
        %v573 = vadd.f32 %v393, %v572
        %v574 = vpop.f32.mrb[0].mxu0
        %v575 = vpop.f32.mrb[0].mxu0
        %v576 = vadd.f32 %v393, %v575
        %v577 = vpop.f32.mrb[0].mxu0
        %578 = vmatprep.mubr.bf16.mxu0 0
        %579 = vmatmul.mubr.bf16.gmra.mrb[0].mxu0 %v459
        %v580 = vpop.f32.mrb[0].mxu0
        %v581 = vadd.f32 %v393, %v580
        %v582 = vpop.f32.mrb[0].mxu0
        %v583 = vpop.f32.mrb[0].mxu0
        %v584 = vadd.f32 %v393, %v583
        %v585 = vpop.f32.mrb[0].mxu0
        %586 = vmatprep.mubr.bf16.mxu0 0
        %587 = vmatmul.mubr.bf16.gmra.mrb[0].mxu0 %v460
        %v588 = vpop.f32.mrb[0].mxu0
        %v589 = vadd.f32 %v393, %v588
        %v590 = vpop.f32.mrb[0].mxu0
        %v591 = vpop.f32.mrb[0].mxu0
        %v592 = vadd.f32 %v393, %v591
        %v593 = vpop.f32.mrb[0].mxu0
        %594 = vmatprep.mubr.bf16.mxu0 0
        %595 = vmatmul.mubr.bf16.gmra.mrb[0].mxu0 %v461
        %v596 = vpop.f32.mrb[0].mxu0
        %v597 = vadd.f32 %v393, %v596
        %v598 = vpop.f32.mrb[0].mxu0
        %v599 = vpop.f32.mrb[0].mxu0
        %v600 = vadd.f32 %v393, %v599
        %v601 = vpop.f32.mrb[0].mxu0
        %602 = vmatprep.mubr.bf16.mxu0 0
        %603 = vmatmul.mubr.bf16.gmra.mrb[0].mxu0 %v462
        %v604 = vpop.f32.mrb[0].mxu0
        %v605 = vadd.f32 %v393, %v604
        %v606 = vpop.f32.mrb[0].mxu0
        %v607 = vpop.f32.mrb[0].mxu0
        %v608 = vadd.f32 %v393, %v607
        %v609 = vpop.f32.mrb[0].mxu0
        %610 = vmatprep.mubr.bf16.mxu0 0
        %611 = vmatmul.mubr.bf16.gmra.mrb[0].mxu0 %v463
        %v612 = vpop.f32.mrb[0].mxu0
        %v613 = vadd.f32 %v393, %v612
        %v614 = vpop.f32.mrb[0].mxu0
        %v615 = vpop.f32.mrb[0].mxu0
        %v616 = vadd.f32 %v393, %v615
        %v617 = vpop.f32.mrb[0].mxu0
        %618 = vmatprep.mubr.bf16.mxu0 0
        %619 = vmatmul.mubr.bf16.gmra.mrb[0].mxu0 %v464
        %v620 = vpop.f32.mrb[0].mxu0
        %v621 = vadd.f32 %v393, %v620
        %v622 = vpop.f32.mrb[0].mxu0
        %v623 = vpop.f32.mrb[0].mxu0
        %v624 = vadd.f32 %v393, %v623
        %v625 = vpop.f32.mrb[0].mxu0
        %626 = vmatprep.mubr.bf16.mxu0 0
        %627 = vmatmul.mubr.bf16.gmra.mrb[0].mxu0 %v465
        %v628 = vpop.f32.mrb[0].mxu0
        %v629 = vadd.f32 %v393, %v628
        %v630 = vpop.f32.mrb[0].mxu0
        %v631 = vpop.f32.mrb[0].mxu0
        %v632 = vadd.f32 %v393, %v631
        %v633 = vpop.f32.mrb[0].mxu0
        %634 = vmatprep.mubr.bf16.mxu0 0
        %635 = vmatmul.mubr.bf16.gmra.mrb[0].mxu0 %v466
        %v636 = vpop.f32.mrb[0].mxu0
        %v637 = vadd.f32 %v393, %v636
        %v638 = vpop.f32.mrb[0].mxu0
        %v639 = vpop.f32.mrb[0].mxu0
        %v640 = vadd.f32 %v393, %v639
        %v641 = vpop.f32.mrb[0].mxu0
        %642 = vmatprep.mubr.bf16.mxu0 0
        %643 = vmatmul.mubr.bf16.gmra.mrb[0].mxu0 %v467
        %v644 = vpop.f32.mrb[0].mxu0
        %v645 = vadd.f32 %v393, %v644
        %v646 = vpop.f32.mrb[0].mxu0
        %v647 = vpop.f32.mrb[0].mxu0
        %v648 = vadd.f32 %v393, %v647
        %v649 = vpop.f32.mrb[0].mxu0
        %650 = vmatprep.mubr.bf16.mxu0 0
        %651 = vmatmul.mubr.bf16.gmra.mrb[0].mxu0 %v468
        %v652 = vpop.f32.mrb[0].mxu0
        %v653 = vadd.f32 %v393, %v652
        %v654 = vpop.f32.mrb[0].mxu0
        %v655 = vpop.f32.mrb[0].mxu0
        %v656 = vadd.f32 %v393, %v655
        %v657 = vpop.f32.mrb[0].mxu0
        %658 = vmatprep.mubr.bf16.mxu0 0
        %659 = vmatmul.mubr.bf16.gmra.mrb[0].mxu0 %v469
        %v660 = vpop.f32.mrb[0].mxu0
        %v661 = vadd.f32 %v393, %v660
        %v662 = vpop.f32.mrb[0].mxu0
        %v663 = vpop.f32.mrb[0].mxu0
        %v664 = vadd.f32 %v393, %v663
        %v665 = vpop.f32.mrb[0].mxu0
        %666 = vmatprep.mubr.bf16.mxu0 0
        %667 = vmatmul.mubr.bf16.gmra.mrb[0].mxu0 %v470
        %v668 = vpop.f32.mrb[0].mxu0
        %v669 = vadd.f32 %v393, %v668
        %v670 = vpop.f32.mrb[0].mxu0
        %v671 = vpop.f32.mrb[0].mxu0
        %v672 = vadd.f32 %v393, %v671
        %v673 = vpop.f32.mrb[0].mxu0
        %674 = vmatprep.mubr.bf16.mxu0 0
        %675 = vmatmul.mubr.bf16.gmra.mrb[0].mxu0 %v471
        %v676 = vpop.f32.mrb[0].mxu0
        %v677 = vadd.f32 %v393, %v676
        %v678 = vpop.f32.mrb[0].mxu0
        %v679 = vpop.f32.mrb[0].mxu0
        %v680 = vadd.f32 %v393, %v679
        %v681 = vpop.f32.mrb[0].mxu0
        %682 = vmatprep.mubr.bf16.mxu0 0
        %683 = vmatmul.mubr.bf16.gmra.mrb[0].mxu0 %v472
        %v684 = vpop.f32.mrb[0].mxu0
        %v685 = vadd.f32 %v393, %v684
        %v686 = vpop.f32.mrb[0].mxu0
        %v687 = vpop.f32.mrb[0].mxu0
        %v688 = vadd.f32 %v393, %v687
        %v689 = vpop.f32.mrb[0].mxu0
        %690 = vmatprep.mubr.bf16.mxu0 0
        %691 = vmatmul.mubr.bf16.gmra.mrb[0].mxu0 %v473
        %v692 = vpop.f32.mrb[0].mxu0
        %v693 = vadd.f32 %v393, %v692
        %v694 = vpop.f32.mrb[0].mxu0
        %v695 = vpop.f32.mrb[0].mxu0
        %v696 = vadd.f32 %v393, %v695
        %v697 = vpop.f32.mrb[0].mxu0
        %698 = vdwg.mxu0
        %v699 = vmax.f32 %v573, 0.0
        %v700 = vmax.f32 %v576, 0.0
        %v701 = vmax.f32 %v581, 0.0
        %v702 = vmax.f32 %v584, 0.0
        %v703 = vmax.f32 %v589, 0.0
        %v704 = vmax.f32 %v592, 0.0
        %v705 = vmax.f32 %v597, 0.0
        %v706 = vmax.f32 %v600, 0.0
        %v707 = vmax.f32 %v605, 0.0
        %v708 = vmax.f32 %v608, 0.0
        %v709 = vmax.f32 %v613, 0.0
        %v710 = vmax.f32 %v616, 0.0
        %v711 = vmax.f32 %v621, 0.0
        %v712 = vmax.f32 %v624, 0.0
        %v713 = vmax.f32 %v629, 0.0
        %v714 = vmax.f32 %v632, 0.0
        %v715 = vmax.f32 %v637, 0.0
        %v716 = vmax.f32 %v640, 0.0
        %v717 = vmax.f32 %v645, 0.0
        %v718 = vmax.f32 %v648, 0.0
        %v719 = vmax.f32 %v653, 0.0
        %v720 = vmax.f32 %v656, 0.0
        %v721 = vmax.f32 %v661, 0.0
        %v722 = vmax.f32 %v664, 0.0
        %v723 = vmax.f32 %v669, 0.0
        %v724 = vmax.f32 %v672, 0.0
        %v725 = vmax.f32 %v677, 0.0
        %v726 = vmax.f32 %v680, 0.0
        %v727 = vmax.f32 %v685, 0.0
        %v728 = vmax.f32 %v688, 0.0
        %v729 = vmax.f32 %v693, 0.0
        %v730 = vmax.f32 %v696, 0.0
        %v731 = vpack.c.bf16 %v700, %v699
        %v732 = vpack.c.bf16 %v702, %v701
        %v733 = vpack.c.bf16 %v704, %v703
        %v734 = vpack.c.bf16 %v706, %v705
        %v735 = vpack.c.bf16 %v708, %v707
        %v736 = vpack.c.bf16 %v710, %v709
        %v737 = vpack.c.bf16 %v712, %v711
        %v738 = vpack.c.bf16 %v714, %v713
        %v739 = vpack.c.bf16 %v716, %v715
        %v740 = vpack.c.bf16 %v718, %v717
        %v741 = vpack.c.bf16 %v720, %v719
        %v742 = vpack.c.bf16 %v722, %v721
        %v743 = vpack.c.bf16 %v724, %v723
        %v744 = vpack.c.bf16 %v726, %v725
        %v745 = vpack.c.bf16 %v728, %v727
        %v746 = vpack.c.bf16 %v730, %v729
        %v747 = vlaneseq
        %v748 = vshrl.u32 %v747, 7
        %v749 = vsub.s32 0, %v748
        %v750 = vrot.slane %v388, %v749
        %v767 = vunpack.c.l.b16 %v354
        %v768 = vunpack.c.l.b16 %v355
        %v769 = vunpack.c.l.b16 %v356
        %v770 = vunpack.c.l.b16 %v357
        %v771 = vunpack.c.l.b16 %v358
        %v772 = vunpack.c.l.b16 %v359
        %v773 = vunpack.c.l.b16 %v360
        %v774 = vunpack.c.l.b16 %v361
        %v775 = vunpack.c.l.b16 %v362
        %v776 = vunpack.c.l.b16 %v363
        %v777 = vunpack.c.l.b16 %v364
        %v778 = vunpack.c.l.b16 %v365
        %v779 = vunpack.c.l.b16 %v366
        %v780 = vunpack.c.l.b16 %v367
        %v781 = vunpack.c.l.b16 %v368
        %v782 = vunpack.c.l.b16 %v369
        %v783 = vpack.c.b16 %v768, %v767
        %v784 = vpack.c.b16 %v770, %v769
        %v785 = vpack.c.b16 %v772, %v771
        %v786 = vpack.c.b16 %v774, %v773
        %v787 = vpack.c.b16 %v776, %v775
        %v788 = vpack.c.b16 %v778, %v777
        %v789 = vpack.c.b16 %v780, %v779
        %v790 = vpack.c.b16 %v782, %v781
        %799 = vmatprep.subr.bf16.mxu0 0
        %800 = vmatpush1.bf16.msra.mxu0 %v783
        %801 = vmatprep.subr.bf16.mxu0 0
        %802 = vmatpush1.bf16.msra.mxu0 %v784
        %803 = vmatprep.subr.bf16.mxu0 0
        %804 = vmatpush1.bf16.msra.mxu0 %v785
        %805 = vmatprep.subr.bf16.mxu0 0
        %806 = vmatpush1.bf16.msra.mxu0 %v786
        %807 = vmatprep.subr.bf16.mxu0 0
        %808 = vmatpush1.bf16.msra.mxu0 %v787
        %809 = vmatprep.subr.bf16.mxu0 0
        %810 = vmatpush1.bf16.msra.mxu0 %v788
        %811 = vmatprep.subr.bf16.mxu0 0
        %812 = vmatpush1.bf16.msra.mxu0 %v789
        %813 = vmatprep.subr.bf16.mxu0 0
        %814 = vmatpush1.bf16.msra.mxu0 %v790
        %815 = vmatprep.subr.bf16.mxu0 0
        %816 = vmatpush1.bf16.msra.mxu0 0
        %817 = vmatprep.subr.bf16.mxu0 0
        %818 = vmatpush1.bf16.msra.mxu0 0
        %819 = vmatprep.subr.bf16.mxu0 0
        %820 = vmatpush1.bf16.msra.mxu0 0
        %821 = vmatprep.subr.bf16.mxu0 0
        %822 = vmatpush1.bf16.msra.mxu0 0
        %823 = vmatprep.subr.bf16.mxu0 0
        %824 = vmatpush1.bf16.msra.mxu0 0
        %825 = vmatprep.subr.bf16.mxu0 0
        %826 = vmatpush1.bf16.msra.mxu0 0
        %827 = vmatprep.subr.bf16.mxu0 0
        %828 = vmatpush1.bf16.msra.mxu0 0
        %829 = vmatprep.subr.bf16.mxu0 0
        %830 = vmatpush1.bf16.msra.mxu0 0
        %831 = vmatprep.mubr.bf16.mxu0 0
        %832 = vmatmul.mubr.bf16.gmra.mrb[0].mxu0 %v731
        %v833 = vpop.f32.mrb[0].mxu0
        %v834 = vadd.f32 %v750, %v833
        %v835 = vpop.f32.mrb[0].mxu0
        %v836 = vpop.f32.mrb[0].mxu0
        %v837 = vadd.f32 %v750, %v836
        %v838 = vpop.f32.mrb[0].mxu0
        %839 = vmatprep.mubr.bf16.mxu0 0
        %840 = vmatmul.mubr.bf16.gmra.mrb[0].mxu0 %v732
        %v841 = vpop.f32.mrb[0].mxu0
        %v842 = vadd.f32 %v750, %v841
        %v843 = vpop.f32.mrb[0].mxu0
        %v844 = vpop.f32.mrb[0].mxu0
        %v845 = vadd.f32 %v750, %v844
        %v846 = vpop.f32.mrb[0].mxu0
        %847 = vmatprep.mubr.bf16.mxu0 0
        %848 = vmatmul.mubr.bf16.gmra.mrb[0].mxu0 %v733
        %v849 = vpop.f32.mrb[0].mxu0
        %v850 = vadd.f32 %v750, %v849
        %v851 = vpop.f32.mrb[0].mxu0
        %v852 = vpop.f32.mrb[0].mxu0
        %v853 = vadd.f32 %v750, %v852
        %v854 = vpop.f32.mrb[0].mxu0
        %855 = vmatprep.mubr.bf16.mxu0 0
        %856 = vmatmul.mubr.bf16.gmra.mrb[0].mxu0 %v734
        %v857 = vpop.f32.mrb[0].mxu0
        %v858 = vadd.f32 %v750, %v857
        %v859 = vpop.f32.mrb[0].mxu0
        %v860 = vpop.f32.mrb[0].mxu0
        %v861 = vadd.f32 %v750, %v860
        %v862 = vpop.f32.mrb[0].mxu0
        %863 = vmatprep.mubr.bf16.mxu0 0
        %864 = vmatmul.mubr.bf16.gmra.mrb[0].mxu0 %v735
        %v865 = vpop.f32.mrb[0].mxu0
        %v866 = vadd.f32 %v750, %v865
        %v867 = vpop.f32.mrb[0].mxu0
        %v868 = vpop.f32.mrb[0].mxu0
        %v869 = vadd.f32 %v750, %v868
        %v870 = vpop.f32.mrb[0].mxu0
        %871 = vmatprep.mubr.bf16.mxu0 0
        %872 = vmatmul.mubr.bf16.gmra.mrb[0].mxu0 %v736
        %v873 = vpop.f32.mrb[0].mxu0
        %v874 = vadd.f32 %v750, %v873
        %v875 = vpop.f32.mrb[0].mxu0
        %v876 = vpop.f32.mrb[0].mxu0
        %v877 = vadd.f32 %v750, %v876
        %v878 = vpop.f32.mrb[0].mxu0
        %879 = vmatprep.mubr.bf16.mxu0 0
        %880 = vmatmul.mubr.bf16.gmra.mrb[0].mxu0 %v737
        %v881 = vpop.f32.mrb[0].mxu0
        %v882 = vadd.f32 %v750, %v881
        %v883 = vpop.f32.mrb[0].mxu0
        %v884 = vpop.f32.mrb[0].mxu0
        %v885 = vadd.f32 %v750, %v884
        %v886 = vpop.f32.mrb[0].mxu0
        %887 = vmatprep.mubr.bf16.mxu0 0
        %888 = vmatmul.mubr.bf16.gmra.mrb[0].mxu0 %v738
        %v889 = vpop.f32.mrb[0].mxu0
        %v890 = vadd.f32 %v750, %v889
        %v891 = vpop.f32.mrb[0].mxu0
        %v892 = vpop.f32.mrb[0].mxu0
        %v893 = vadd.f32 %v750, %v892
        %v894 = vpop.f32.mrb[0].mxu0
        %895 = vmatprep.mubr.bf16.mxu0 0
        %896 = vmatmul.mubr.bf16.gmra.mrb[0].mxu0 %v739
        %v897 = vpop.f32.mrb[0].mxu0
        %v898 = vadd.f32 %v750, %v897
        %v899 = vpop.f32.mrb[0].mxu0
        %v900 = vpop.f32.mrb[0].mxu0
        %v901 = vadd.f32 %v750, %v900
        %v902 = vpop.f32.mrb[0].mxu0
        %903 = vmatprep.mubr.bf16.mxu0 0
        %904 = vmatmul.mubr.bf16.gmra.mrb[0].mxu0 %v740
        %v905 = vpop.f32.mrb[0].mxu0
        %v906 = vadd.f32 %v750, %v905
        %v907 = vpop.f32.mrb[0].mxu0
        %v908 = vpop.f32.mrb[0].mxu0
        %v909 = vadd.f32 %v750, %v908
        %v910 = vpop.f32.mrb[0].mxu0
        %911 = vmatprep.mubr.bf16.mxu0 0
        %912 = vmatmul.mubr.bf16.gmra.mrb[0].mxu0 %v741
        %v913 = vpop.f32.mrb[0].mxu0
        %v914 = vadd.f32 %v750, %v913
        %v915 = vpop.f32.mrb[0].mxu0
        %v916 = vpop.f32.mrb[0].mxu0
        %v917 = vadd.f32 %v750, %v916
        %v918 = vpop.f32.mrb[0].mxu0
        %919 = vmatprep.mubr.bf16.mxu0 0
        %920 = vmatmul.mubr.bf16.gmra.mrb[0].mxu0 %v742
        %v921 = vpop.f32.mrb[0].mxu0
        %v922 = vadd.f32 %v750, %v921
        %v923 = vpop.f32.mrb[0].mxu0
        %v924 = vpop.f32.mrb[0].mxu0
        %v925 = vadd.f32 %v750, %v924
        %v926 = vpop.f32.mrb[0].mxu0
        %927 = vmatprep.mubr.bf16.mxu0 0
        %928 = vmatmul.mubr.bf16.gmra.mrb[0].mxu0 %v743
        %v929 = vpop.f32.mrb[0].mxu0
        %v930 = vadd.f32 %v750, %v929
        %v931 = vpop.f32.mrb[0].mxu0
        %v932 = vpop.f32.mrb[0].mxu0
        %v933 = vadd.f32 %v750, %v932
        %v934 = vpop.f32.mrb[0].mxu0
        %935 = vmatprep.mubr.bf16.mxu0 0
        %936 = vmatmul.mubr.bf16.gmra.mrb[0].mxu0 %v744
        %v937 = vpop.f32.mrb[0].mxu0
        %v938 = vadd.f32 %v750, %v937
        %v939 = vpop.f32.mrb[0].mxu0
        %v940 = vpop.f32.mrb[0].mxu0
        %v941 = vadd.f32 %v750, %v940
        %v942 = vpop.f32.mrb[0].mxu0
        %943 = vmatprep.mubr.bf16.mxu0 0
        %944 = vmatmul.mubr.bf16.gmra.mrb[0].mxu0 %v745
        %v945 = vpop.f32.mrb[0].mxu0
        %v946 = vadd.f32 %v750, %v945
        %v947 = vpop.f32.mrb[0].mxu0
        %v948 = vpop.f32.mrb[0].mxu0
        %v949 = vadd.f32 %v750, %v948
        %v950 = vpop.f32.mrb[0].mxu0
        %951 = vmatprep.mubr.bf16.mxu0 0
        %952 = vmatmul.mubr.bf16.gmra.mrb[0].mxu0 %v746
        %v953 = vpop.f32.mrb[0].mxu0
        %v954 = vadd.f32 %v750, %v953
        %v955 = vpop.f32.mrb[0].mxu0
        %v956 = vpop.f32.mrb[0].mxu0
        %v957 = vadd.f32 %v750, %v956
        %v958 = vpop.f32.mrb[0].mxu0
        %959 = vdwg.mxu0
        %v960 = vmax.f32 %v834, 0.0
        %v961 = vmax.f32 %v837, 0.0
        %v962 = vmax.f32 %v842, 0.0
        %v963 = vmax.f32 %v845, 0.0
        %v964 = vmax.f32 %v850, 0.0
        %v965 = vmax.f32 %v853, 0.0
        %v966 = vmax.f32 %v858, 0.0
        %v967 = vmax.f32 %v861, 0.0
        %v968 = vmax.f32 %v866, 0.0
        %v969 = vmax.f32 %v869, 0.0
        %v970 = vmax.f32 %v874, 0.0
        %v971 = vmax.f32 %v877, 0.0
        %v972 = vmax.f32 %v882, 0.0
        %v973 = vmax.f32 %v885, 0.0
        %v974 = vmax.f32 %v890, 0.0
        %v975 = vmax.f32 %v893, 0.0
        %v976 = vmax.f32 %v898, 0.0
        %v977 = vmax.f32 %v901, 0.0
        %v978 = vmax.f32 %v906, 0.0
        %v979 = vmax.f32 %v909, 0.0
        %v980 = vmax.f32 %v914, 0.0
        %v981 = vmax.f32 %v917, 0.0
        %v982 = vmax.f32 %v922, 0.0
        %v983 = vmax.f32 %v925, 0.0
        %v984 = vmax.f32 %v930, 0.0
        %v985 = vmax.f32 %v933, 0.0
        %v986 = vmax.f32 %v938, 0.0
        %v987 = vmax.f32 %v941, 0.0
        %v988 = vmax.f32 %v946, 0.0
        %v989 = vmax.f32 %v949, 0.0
        %v990 = vmax.f32 %v954, 0.0
        %v991 = vmax.f32 %v957, 0.0
        %v992 = vpack.c.bf16 %v961, %v960
        %v993 = vpack.c.bf16 %v963, %v962
        %v994 = vpack.c.bf16 %v965, %v964
        %v995 = vpack.c.bf16 %v967, %v966
        %v996 = vpack.c.bf16 %v969, %v968
        %v997 = vpack.c.bf16 %v971, %v970
        %v998 = vpack.c.bf16 %v973, %v972
        %v999 = vpack.c.bf16 %v975, %v974
        %v1000 = vpack.c.bf16 %v977, %v976
        %v1001 = vpack.c.bf16 %v979, %v978
        %v1002 = vpack.c.bf16 %v981, %v980
        %v1003 = vpack.c.bf16 %v983, %v982
        %v1004 = vpack.c.bf16 %v985, %v984
        %v1005 = vpack.c.bf16 %v987, %v986
        %v1006 = vpack.c.bf16 %v989, %v988
        %v1007 = vpack.c.bf16 %v991, %v990
        %v1008 = vlaneseq
        %v1009 = vshrl.u32 %v1008, 7
        %v1010 = vsub.s32 0, %v1009
        %v1011 = vrot.slane %v389, %v1010
        %v1028 = vunpack.c.l.b16 %v371
        %v1029 = vunpack.c.l.b16 %v372
        %v1030 = vunpack.c.l.b16 %v373
        %v1031 = vunpack.c.l.b16 %v374
        %v1032 = vunpack.c.l.b16 %v375
        %v1033 = vunpack.c.l.b16 %v376
        %v1034 = vunpack.c.l.b16 %v377
        %v1035 = vunpack.c.l.b16 %v378
        %v1036 = vunpack.c.l.b16 %v379
        %v1037 = vunpack.c.l.b16 %v380
        %v1038 = vunpack.c.l.b16 %v381
        %v1039 = vunpack.c.l.b16 %v382
        %v1040 = vunpack.c.l.b16 %v383
        %v1041 = vunpack.c.l.b16 %v384
        %v1042 = vunpack.c.l.b16 %v385
        %v1043 = vunpack.c.l.b16 %v386
        %v1044 = vpack.c.b16 %v1029, %v1028
        %v1045 = vpack.c.b16 %v1031, %v1030
        %v1046 = vpack.c.b16 %v1033, %v1032
        %v1047 = vpack.c.b16 %v1035, %v1034
        %v1048 = vpack.c.b16 %v1037, %v1036
        %v1049 = vpack.c.b16 %v1039, %v1038
        %v1050 = vpack.c.b16 %v1041, %v1040
        %v1051 = vpack.c.b16 %v1043, %v1042
        %1060 = vmatprep.subr.bf16.mxu0 0
        %1061 = vmatpush1.bf16.msra.mxu0 %v1044
        %1062 = vmatprep.subr.bf16.mxu0 0
        %1063 = vmatpush1.bf16.msra.mxu0 %v1045
        %1064 = vmatprep.subr.bf16.mxu0 0
        %1065 = vmatpush1.bf16.msra.mxu0 %v1046
        %1066 = vmatprep.subr.bf16.mxu0 0
        %1067 = vmatpush1.bf16.msra.mxu0 %v1047
        %1068 = vmatprep.subr.bf16.mxu0 0
        %1069 = vmatpush1.bf16.msra.mxu0 %v1048
        %1070 = vmatprep.subr.bf16.mxu0 0
        %1071 = vmatpush1.bf16.msra.mxu0 %v1049
        %1072 = vmatprep.subr.bf16.mxu0 0
        %1073 = vmatpush1.bf16.msra.mxu0 %v1050
        %1074 = vmatprep.subr.bf16.mxu0 0
        %1075 = vmatpush1.bf16.msra.mxu0 %v1051
        %1076 = vmatprep.subr.bf16.mxu0 0
        %1077 = vmatpush1.bf16.msra.mxu0 0
        %1078 = vmatprep.subr.bf16.mxu0 0
        %1079 = vmatpush1.bf16.msra.mxu0 0
        %1080 = vmatprep.subr.bf16.mxu0 0
        %1081 = vmatpush1.bf16.msra.mxu0 0
        %1082 = vmatprep.subr.bf16.mxu0 0
        %1083 = vmatpush1.bf16.msra.mxu0 0
        %1084 = vmatprep.subr.bf16.mxu0 0
        %1085 = vmatpush1.bf16.msra.mxu0 0
        %1086 = vmatprep.subr.bf16.mxu0 0
        %1087 = vmatpush1.bf16.msra.mxu0 0
        %1088 = vmatprep.subr.bf16.mxu0 0
        %1089 = vmatpush1.bf16.msra.mxu0 0
        %1090 = vmatprep.subr.bf16.mxu0 0
        %1091 = vmatpush1.bf16.msra.mxu0 0
        %1092 = vmatprep.mubr.bf16.mxu0 0
        %1093 = vmatmul.mubr.bf16.gmra.mrb[0].mxu0 %v992
        %v1094 = vpop.f32.mrb[0].mxu0
        %v1095 = vadd.f32 %v1011, %v1094
        %v1096 = vpop.f32.mrb[0].mxu0
        %v1097 = vpop.f32.mrb[0].mxu0
        %v1098 = vadd.f32 %v1011, %v1097
        %v1099 = vpop.f32.mrb[0].mxu0
        %1100 = vmatprep.mubr.bf16.mxu0 0
        %1101 = vmatmul.mubr.bf16.gmra.mrb[0].mxu0 %v993
        %v1102 = vpop.f32.mrb[0].mxu0
        %v1103 = vadd.f32 %v1011, %v1102
        %v1104 = vpop.f32.mrb[0].mxu0
        %v1105 = vpop.f32.mrb[0].mxu0
        %v1106 = vadd.f32 %v1011, %v1105
        %v1107 = vpop.f32.mrb[0].mxu0
        %1108 = vmatprep.mubr.bf16.mxu0 0
        %1109 = vmatmul.mubr.bf16.gmra.mrb[0].mxu0 %v994
        %v1110 = vpop.f32.mrb[0].mxu0
        %v1111 = vadd.f32 %v1011, %v1110
        %v1112 = vpop.f32.mrb[0].mxu0
        %v1113 = vpop.f32.mrb[0].mxu0
        %v1114 = vadd.f32 %v1011, %v1113
        %v1115 = vpop.f32.mrb[0].mxu0
        %1116 = vmatprep.mubr.bf16.mxu0 0
        %1117 = vmatmul.mubr.bf16.gmra.mrb[0].mxu0 %v995
        %v1118 = vpop.f32.mrb[0].mxu0
        %v1119 = vadd.f32 %v1011, %v1118
        %v1120 = vpop.f32.mrb[0].mxu0
        %v1121 = vpop.f32.mrb[0].mxu0
        %v1122 = vadd.f32 %v1011, %v1121
        %v1123 = vpop.f32.mrb[0].mxu0
        %1124 = vmatprep.mubr.bf16.mxu0 0
        %1125 = vmatmul.mubr.bf16.gmra.mrb[0].mxu0 %v996
        %v1126 = vpop.f32.mrb[0].mxu0
        %v1127 = vadd.f32 %v1011, %v1126
        %v1128 = vpop.f32.mrb[0].mxu0
        %v1129 = vpop.f32.mrb[0].mxu0
        %v1130 = vadd.f32 %v1011, %v1129
        %v1131 = vpop.f32.mrb[0].mxu0
        %1132 = vmatprep.mubr.bf16.mxu0 0
        %1133 = vmatmul.mubr.bf16.gmra.mrb[0].mxu0 %v997
        %v1134 = vpop.f32.mrb[0].mxu0
        %v1135 = vadd.f32 %v1011, %v1134
        %v1136 = vpop.f32.mrb[0].mxu0
        %v1137 = vpop.f32.mrb[0].mxu0
        %v1138 = vadd.f32 %v1011, %v1137
        %v1139 = vpop.f32.mrb[0].mxu0
        %1140 = vmatprep.mubr.bf16.mxu0 0
        %1141 = vmatmul.mubr.bf16.gmra.mrb[0].mxu0 %v998
        %v1142 = vpop.f32.mrb[0].mxu0
        %v1143 = vadd.f32 %v1011, %v1142
        %v1144 = vpop.f32.mrb[0].mxu0
        %v1145 = vpop.f32.mrb[0].mxu0
        %v1146 = vadd.f32 %v1011, %v1145
        %v1147 = vpop.f32.mrb[0].mxu0
        %1148 = vmatprep.mubr.bf16.mxu0 0
        %1149 = vmatmul.mubr.bf16.gmra.mrb[0].mxu0 %v999
        %v1150 = vpop.f32.mrb[0].mxu0
        %v1151 = vadd.f32 %v1011, %v1150
        %v1152 = vpop.f32.mrb[0].mxu0
        %v1153 = vpop.f32.mrb[0].mxu0
        %v1154 = vadd.f32 %v1011, %v1153
        %v1155 = vpop.f32.mrb[0].mxu0
        %1156 = vmatprep.mubr.bf16.mxu0 0
        %1157 = vmatmul.mubr.bf16.gmra.mrb[0].mxu0 %v1000
        %v1158 = vpop.f32.mrb[0].mxu0
        %v1159 = vadd.f32 %v1011, %v1158
        %v1160 = vpop.f32.mrb[0].mxu0
        %v1161 = vpop.f32.mrb[0].mxu0
        %v1162 = vadd.f32 %v1011, %v1161
        %v1163 = vpop.f32.mrb[0].mxu0
        %1164 = vmatprep.mubr.bf16.mxu0 0
        %1165 = vmatmul.mubr.bf16.gmra.mrb[0].mxu0 %v1001
        %v1166 = vpop.f32.mrb[0].mxu0
        %v1167 = vadd.f32 %v1011, %v1166
        %v1168 = vpop.f32.mrb[0].mxu0
        %v1169 = vpop.f32.mrb[0].mxu0
        %v1170 = vadd.f32 %v1011, %v1169
        %v1171 = vpop.f32.mrb[0].mxu0
        %1172 = vmatprep.mubr.bf16.mxu0 0
        %1173 = vmatmul.mubr.bf16.gmra.mrb[0].mxu0 %v1002
        %v1174 = vpop.f32.mrb[0].mxu0
        %v1175 = vadd.f32 %v1011, %v1174
        %v1176 = vpop.f32.mrb[0].mxu0
        %v1177 = vpop.f32.mrb[0].mxu0
        %v1178 = vadd.f32 %v1011, %v1177
        %v1179 = vpop.f32.mrb[0].mxu0
        %1180 = vmatprep.mubr.bf16.mxu0 0
        %1181 = vmatmul.mubr.bf16.gmra.mrb[0].mxu0 %v1003
        %v1182 = vpop.f32.mrb[0].mxu0
        %v1183 = vadd.f32 %v1011, %v1182
        %v1184 = vpop.f32.mrb[0].mxu0
        %v1185 = vpop.f32.mrb[0].mxu0
        %v1186 = vadd.f32 %v1011, %v1185
        %v1187 = vpop.f32.mrb[0].mxu0
        %1188 = vmatprep.mubr.bf16.mxu0 0
        %1189 = vmatmul.mubr.bf16.gmra.mrb[0].mxu0 %v1004
        %v1190 = vpop.f32.mrb[0].mxu0
        %v1191 = vadd.f32 %v1011, %v1190
        %v1192 = vpop.f32.mrb[0].mxu0
        %v1193 = vpop.f32.mrb[0].mxu0
        %v1194 = vadd.f32 %v1011, %v1193
        %v1195 = vpop.f32.mrb[0].mxu0
        %1196 = vmatprep.mubr.bf16.mxu0 0
        %1197 = vmatmul.mubr.bf16.gmra.mrb[0].mxu0 %v1005
        %v1198 = vpop.f32.mrb[0].mxu0
        %v1199 = vadd.f32 %v1011, %v1198
        %v1200 = vpop.f32.mrb[0].mxu0
        %v1201 = vpop.f32.mrb[0].mxu0
        %v1202 = vadd.f32 %v1011, %v1201
        %v1203 = vpop.f32.mrb[0].mxu0
        %1204 = vmatprep.mubr.bf16.mxu0 0
        %1205 = vmatmul.mubr.bf16.gmra.mrb[0].mxu0 %v1006
        %v1206 = vpop.f32.mrb[0].mxu0
        %v1207 = vadd.f32 %v1011, %v1206
        %v1208 = vpop.f32.mrb[0].mxu0
        %v1209 = vpop.f32.mrb[0].mxu0
        %v1210 = vadd.f32 %v1011, %v1209
        %v1211 = vpop.f32.mrb[0].mxu0
        %1212 = vmatprep.mubr.bf16.mxu0 0
        %1213 = vmatmul.mubr.bf16.gmra.mrb[0].mxu0 %v1007
        %v1214 = vpop.f32.mrb[0].mxu0
        %v1215 = vadd.f32 %v1011, %v1214
        %v1216 = vpop.f32.mrb[0].mxu0
        %v1217 = vpop.f32.mrb[0].mxu0
        %v1218 = vadd.f32 %v1011, %v1217
        %v1219 = vpop.f32.mrb[0].mxu0
        %1220 = vdwg.mxu0
        %v1221 = vadd.f32 %v305, %v1095
        %v1222 = vadd.f32 %v306, %v1098
        %v1223 = vadd.f32 %v307, %v1103
        %v1224 = vadd.f32 %v308, %v1106
        %v1225 = vadd.f32 %v309, %v1111
        %v1226 = vadd.f32 %v310, %v1114
        %v1227 = vadd.f32 %v311, %v1119
        %v1228 = vadd.f32 %v312, %v1122
        %v1229 = vadd.f32 %v313, %v1127
        %v1230 = vadd.f32 %v314, %v1130
        %v1231 = vadd.f32 %v315, %v1135
        %v1232 = vadd.f32 %v316, %v1138
        %v1233 = vadd.f32 %v317, %v1143
        %v1234 = vadd.f32 %v318, %v1146
        %v1235 = vadd.f32 %v319, %v1151
        %v1236 = vadd.f32 %v320, %v1154
        %v1237 = vadd.f32 %v321, %v1159
        %v1238 = vadd.f32 %v322, %v1162
        %v1239 = vadd.f32 %v323, %v1167
        %v1240 = vadd.f32 %v324, %v1170
        %v1241 = vadd.f32 %v325, %v1175
        %v1242 = vadd.f32 %v326, %v1178
        %v1243 = vadd.f32 %v327, %v1183
        %v1244 = vadd.f32 %v328, %v1186
        %v1245 = vadd.f32 %v329, %v1191
        %v1246 = vadd.f32 %v330, %v1194
        %v1247 = vadd.f32 %v331, %v1199
        %v1248 = vadd.f32 %v332, %v1202
        %v1249 = vadd.f32 %v333, %v1207
        %v1250 = vadd.f32 %v334, %v1210
        %v1251 = vadd.f32 %v335, %v1215
        %v1252 = vadd.f32 %v336, %v1218
        %s1253 = scalar_lea.vmem [#allocation5], 192
        %v1254 = vld [vmem:[%s1253] sm:$0xf]
        %v1255 = vld [vmem:[%s1253 + $0x4] sm:$0xf]
        %v1256 = vld [vmem:[%s1253 + $0x8] sm:$0xf]
        %v1257 = vld [vmem:[%s1253 + $0xc] sm:$0xf]
        %v1258 = vld [vmem:[%s1253 + $0x10] sm:$0xf]
        %v1259 = vld [vmem:[%s1253 + $0x14] sm:$0xf]
        %v1260 = vld [vmem:[%s1253 + $0x18] sm:$0xf]
        %v1261 = vld [vmem:[%s1253 + $0x1c] sm:$0xf]
        %v1262 = vld [vmem:[%s1253 + $0x20] sm:$0xf]
        %v1263 = vld [vmem:[%s1253 + $0x24] sm:$0xf]
        %v1264 = vld [vmem:[%s1253 + $0x28] sm:$0xf]
        %v1265 = vld [vmem:[%s1253 + $0x2c] sm:$0xf]
        %v1266 = vld [vmem:[%s1253 + $0x30] sm:$0xf]
        %v1267 = vld [vmem:[%s1253 + $0x34] sm:$0xf]
        %v1268 = vld [vmem:[%s1253 + $0x38] sm:$0xf]
        %v1269 = vld [vmem:[%s1253 + $0x3c] sm:$0xf]
        %s1270 = scalar_lea.vmem [#allocation5], 256
        %v1271 = vld [vmem:[%s1270] sm:$0xf]
        %v1272 = vld [vmem:[%s1270 + $0x4] sm:$0xf]
        %v1273 = vld [vmem:[%s1270 + $0x8] sm:$0xf]
        %v1274 = vld [vmem:[%s1270 + $0xc] sm:$0xf]
        %v1275 = vld [vmem:[%s1270 + $0x10] sm:$0xf]
        %v1276 = vld [vmem:[%s1270 + $0x14] sm:$0xf]
        %v1277 = vld [vmem:[%s1270 + $0x18] sm:$0xf]
        %v1278 = vld [vmem:[%s1270 + $0x1c] sm:$0xf]
        %v1279 = vld [vmem:[%s1270 + $0x20] sm:$0xf]
        %v1280 = vld [vmem:[%s1270 + $0x24] sm:$0xf]
        %v1281 = vld [vmem:[%s1270 + $0x28] sm:$0xf]
        %v1282 = vld [vmem:[%s1270 + $0x2c] sm:$0xf]
        %v1283 = vld [vmem:[%s1270 + $0x30] sm:$0xf]
        %v1284 = vld [vmem:[%s1270 + $0x34] sm:$0xf]
        %v1285 = vld [vmem:[%s1270 + $0x38] sm:$0xf]
        %v1286 = vld [vmem:[%s1270 + $0x3c] sm:$0xf]
        %s1287 = scalar_lea.vmem [#allocation5], 320
        %v1288 = vld [vmem:[%s1287] sm:$0xf]
        %v1289 = vld [vmem:[%s1287 + $0x4] sm:$0xf]
        %v1290 = vld [vmem:[%s1287 + $0x8] sm:$0xf]
        %v1291 = vld [vmem:[%s1287 + $0xc] sm:$0xf]
        %v1292 = vld [vmem:[%s1287 + $0x10] sm:$0xf]
        %v1293 = vld [vmem:[%s1287 + $0x14] sm:$0xf]
        %v1294 = vld [vmem:[%s1287 + $0x18] sm:$0xf]
        %v1295 = vld [vmem:[%s1287 + $0x1c] sm:$0xf]
        %v1296 = vld [vmem:[%s1287 + $0x20] sm:$0xf]
        %v1297 = vld [vmem:[%s1287 + $0x24] sm:$0xf]
        %v1298 = vld [vmem:[%s1287 + $0x28] sm:$0xf]
        %v1299 = vld [vmem:[%s1287 + $0x2c] sm:$0xf]
        %v1300 = vld [vmem:[%s1287 + $0x30] sm:$0xf]
        %v1301 = vld [vmem:[%s1287 + $0x34] sm:$0xf]
        %v1302 = vld [vmem:[%s1287 + $0x38] sm:$0xf]
        %v1303 = vld [vmem:[%s1287 + $0x3c] sm:$0xf]
        %v1304 = vld [vmem:[#allocation7 + $0x3] sm:$0x1]
        %v1305 = vld [vmem:[#allocation7 + $0x4] sm:$0x1]
        %v1306 = vld [vmem:[#allocation7 + $0x5] sm:$0x1]
        %v1307 = vpack.c.bf16 %v1222, %v1221
        %v1308 = vpack.c.bf16 %v1224, %v1223
        %v1309 = vpack.c.bf16 %v1226, %v1225
        %v1310 = vpack.c.bf16 %v1228, %v1227
        %v1311 = vpack.c.bf16 %v1230, %v1229
        %v1312 = vpack.c.bf16 %v1232, %v1231
        %v1313 = vpack.c.bf16 %v1234, %v1233
        %v1314 = vpack.c.bf16 %v1236, %v1235
        %v1315 = vpack.c.bf16 %v1238, %v1237
        %v1316 = vpack.c.bf16 %v1240, %v1239
        %v1317 = vpack.c.bf16 %v1242, %v1241
        %v1318 = vpack.c.bf16 %v1244, %v1243
        %v1319 = vpack.c.bf16 %v1246, %v1245
        %v1320 = vpack.c.bf16 %v1248, %v1247
        %v1321 = vpack.c.bf16 %v1250, %v1249
        %v1322 = vpack.c.bf16 %v1252, %v1251
        %v1323 = vlaneseq
        %v1324 = vshrl.u32 %v1323, 7
        %v1325 = vsub.s32 0, %v1324
        %v1326 = vrot.slane %v1304, %v1325
        %v1343 = vunpack.c.l.b16 %v1254
        %v1344 = vunpack.c.l.b16 %v1255
        %v1345 = vunpack.c.l.b16 %v1256
        %v1346 = vunpack.c.l.b16 %v1257
        %v1347 = vunpack.c.l.b16 %v1258
        %v1348 = vunpack.c.l.b16 %v1259
        %v1349 = vunpack.c.l.b16 %v1260
        %v1350 = vunpack.c.l.b16 %v1261
        %v1351 = vunpack.c.l.b16 %v1262
        %v1352 = vunpack.c.l.b16 %v1263
        %v1353 = vunpack.c.l.b16 %v1264
        %v1354 = vunpack.c.l.b16 %v1265
        %v1355 = vunpack.c.l.b16 %v1266
        %v1356 = vunpack.c.l.b16 %v1267
        %v1357 = vunpack.c.l.b16 %v1268
        %v1358 = vunpack.c.l.b16 %v1269
        %v1359 = vpack.c.b16 %v1344, %v1343
        %v1360 = vpack.c.b16 %v1346, %v1345
        %v1361 = vpack.c.b16 %v1348, %v1347
        %v1362 = vpack.c.b16 %v1350, %v1349
        %v1363 = vpack.c.b16 %v1352, %v1351
        %v1364 = vpack.c.b16 %v1354, %v1353
        %v1365 = vpack.c.b16 %v1356, %v1355
        %v1366 = vpack.c.b16 %v1358, %v1357
        %1375 = vmatprep.subr.bf16.mxu0 0
        %1376 = vmatpush1.bf16.msra.mxu0 %v1359
        %1377 = vmatprep.subr.bf16.mxu0 0
        %1378 = vmatpush1.bf16.msra.mxu0 %v1360
        %1379 = vmatprep.subr.bf16.mxu0 0
        %1380 = vmatpush1.bf16.msra.mxu0 %v1361
        %1381 = vmatprep.subr.bf16.mxu0 0
        %1382 = vmatpush1.bf16.msra.mxu0 %v1362
        %1383 = vmatprep.subr.bf16.mxu0 0
        %1384 = vmatpush1.bf16.msra.mxu0 %v1363
        %1385 = vmatprep.subr.bf16.mxu0 0
        %1386 = vmatpush1.bf16.msra.mxu0 %v1364
        %1387 = vmatprep.subr.bf16.mxu0 0
        %1388 = vmatpush1.bf16.msra.mxu0 %v1365
        %1389 = vmatprep.subr.bf16.mxu0 0
        %1390 = vmatpush1.bf16.msra.mxu0 %v1366
        %1391 = vmatprep.subr.bf16.mxu0 0
        %1392 = vmatpush1.bf16.msra.mxu0 0
        %1393 = vmatprep.subr.bf16.mxu0 0
        %1394 = vmatpush1.bf16.msra.mxu0 0
        %1395 = vmatprep.subr.bf16.mxu0 0
        %1396 = vmatpush1.bf16.msra.mxu0 0
        %1397 = vmatprep.subr.bf16.mxu0 0
        %1398 = vmatpush1.bf16.msra.mxu0 0
        %1399 = vmatprep.subr.bf16.mxu0 0
        %1400 = vmatpush1.bf16.msra.mxu0 0
        %1401 = vmatprep.subr.bf16.mxu0 0
        %1402 = vmatpush1.bf16.msra.mxu0 0
        %1403 = vmatprep.subr.bf16.mxu0 0
        %1404 = vmatpush1.bf16.msra.mxu0 0
        %1405 = vmatprep.subr.bf16.mxu0 0
        %1406 = vmatpush1.bf16.msra.mxu0 0
        %1407 = vmatprep.mubr.bf16.mxu0 0
        %1408 = vmatmul.mubr.bf16.gmra.mrb[0].mxu0 %v1307
        %v1409 = vpop.f32.mrb[0].mxu0
        %v1410 = vadd.f32 %v1326, %v1409
        %v1411 = vpop.f32.mrb[0].mxu0
        %v1412 = vpop.f32.mrb[0].mxu0
        %v1413 = vadd.f32 %v1326, %v1412
        %v1414 = vpop.f32.mrb[0].mxu0
        %1415 = vmatprep.mubr.bf16.mxu0 0
        %1416 = vmatmul.mubr.bf16.gmra.mrb[0].mxu0 %v1308
        %v1417 = vpop.f32.mrb[0].mxu0
        %v1418 = vadd.f32 %v1326, %v1417
        %v1419 = vpop.f32.mrb[0].mxu0
        %v1420 = vpop.f32.mrb[0].mxu0
        %v1421 = vadd.f32 %v1326, %v1420
        %v1422 = vpop.f32.mrb[0].mxu0
        %1423 = vmatprep.mubr.bf16.mxu0 0
        %1424 = vmatmul.mubr.bf16.gmra.mrb[0].mxu0 %v1309
        %v1425 = vpop.f32.mrb[0].mxu0
        %v1426 = vadd.f32 %v1326, %v1425
        %v1427 = vpop.f32.mrb[0].mxu0
        %v1428 = vpop.f32.mrb[0].mxu0
        %v1429 = vadd.f32 %v1326, %v1428
        %v1430 = vpop.f32.mrb[0].mxu0
        %1431 = vmatprep.mubr.bf16.mxu0 0
        %1432 = vmatmul.mubr.bf16.gmra.mrb[0].mxu0 %v1310
        %v1433 = vpop.f32.mrb[0].mxu0
        %v1434 = vadd.f32 %v1326, %v1433
        %v1435 = vpop.f32.mrb[0].mxu0
        %v1436 = vpop.f32.mrb[0].mxu0
        %v1437 = vadd.f32 %v1326, %v1436
        %v1438 = vpop.f32.mrb[0].mxu0
        %1439 = vmatprep.mubr.bf16.mxu0 0
        %1440 = vmatmul.mubr.bf16.gmra.mrb[0].mxu0 %v1311
        %v1441 = vpop.f32.mrb[0].mxu0
        %v1442 = vadd.f32 %v1326, %v1441
        %v1443 = vpop.f32.mrb[0].mxu0
        %v1444 = vpop.f32.mrb[0].mxu0
        %v1445 = vadd.f32 %v1326, %v1444
        %v1446 = vpop.f32.mrb[0].mxu0
        %1447 = vmatprep.mubr.bf16.mxu0 0
        %1448 = vmatmul.mubr.bf16.gmra.mrb[0].mxu0 %v1312
        %v1449 = vpop.f32.mrb[0].mxu0
        %v1450 = vadd.f32 %v1326, %v1449
        %v1451 = vpop.f32.mrb[0].mxu0
        %v1452 = vpop.f32.mrb[0].mxu0
        %v1453 = vadd.f32 %v1326, %v1452
        %v1454 = vpop.f32.mrb[0].mxu0
        %1455 = vmatprep.mubr.bf16.mxu0 0
        %1456 = vmatmul.mubr.bf16.gmra.mrb[0].mxu0 %v1313
        %v1457 = vpop.f32.mrb[0].mxu0
        %v1458 = vadd.f32 %v1326, %v1457
        %v1459 = vpop.f32.mrb[0].mxu0
        %v1460 = vpop.f32.mrb[0].mxu0
        %v1461 = vadd.f32 %v1326, %v1460
        %v1462 = vpop.f32.mrb[0].mxu0
        %1463 = vmatprep.mubr.bf16.mxu0 0
        %1464 = vmatmul.mubr.bf16.gmra.mrb[0].mxu0 %v1314
        %v1465 = vpop.f32.mrb[0].mxu0
        %v1466 = vadd.f32 %v1326, %v1465
        %v1467 = vpop.f32.mrb[0].mxu0
        %v1468 = vpop.f32.mrb[0].mxu0
        %v1469 = vadd.f32 %v1326, %v1468
        %v1470 = vpop.f32.mrb[0].mxu0
        %1471 = vmatprep.mubr.bf16.mxu0 0
        %1472 = vmatmul.mubr.bf16.gmra.mrb[0].mxu0 %v1315
        %v1473 = vpop.f32.mrb[0].mxu0
        %v1474 = vadd.f32 %v1326, %v1473
        %v1475 = vpop.f32.mrb[0].mxu0
        %v1476 = vpop.f32.mrb[0].mxu0
        %v1477 = vadd.f32 %v1326, %v1476
        %v1478 = vpop.f32.mrb[0].mxu0
        %1479 = vmatprep.mubr.bf16.mxu0 0
        %1480 = vmatmul.mubr.bf16.gmra.mrb[0].mxu0 %v1316
        %v1481 = vpop.f32.mrb[0].mxu0
        %v1482 = vadd.f32 %v1326, %v1481
        %v1483 = vpop.f32.mrb[0].mxu0
        %v1484 = vpop.f32.mrb[0].mxu0
        %v1485 = vadd.f32 %v1326, %v1484
        %v1486 = vpop.f32.mrb[0].mxu0
        %1487 = vmatprep.mubr.bf16.mxu0 0
        %1488 = vmatmul.mubr.bf16.gmra.mrb[0].mxu0 %v1317
        %v1489 = vpop.f32.mrb[0].mxu0
        %v1490 = vadd.f32 %v1326, %v1489
        %v1491 = vpop.f32.mrb[0].mxu0
        %v1492 = vpop.f32.mrb[0].mxu0
        %v1493 = vadd.f32 %v1326, %v1492
        %v1494 = vpop.f32.mrb[0].mxu0
        %1495 = vmatprep.mubr.bf16.mxu0 0
        %1496 = vmatmul.mubr.bf16.gmra.mrb[0].mxu0 %v1318
        %v1497 = vpop.f32.mrb[0].mxu0
        %v1498 = vadd.f32 %v1326, %v1497
        %v1499 = vpop.f32.mrb[0].mxu0
        %v1500 = vpop.f32.mrb[0].mxu0
        %v1501 = vadd.f32 %v1326, %v1500
        %v1502 = vpop.f32.mrb[0].mxu0
        %1503 = vmatprep.mubr.bf16.mxu0 0
        %1504 = vmatmul.mubr.bf16.gmra.mrb[0].mxu0 %v1319
        %v1505 = vpop.f32.mrb[0].mxu0
        %v1506 = vadd.f32 %v1326, %v1505
        %v1507 = vpop.f32.mrb[0].mxu0
        %v1508 = vpop.f32.mrb[0].mxu0
        %v1509 = vadd.f32 %v1326, %v1508
        %v1510 = vpop.f32.mrb[0].mxu0
        %1511 = vmatprep.mubr.bf16.mxu0 0
        %1512 = vmatmul.mubr.bf16.gmra.mrb[0].mxu0 %v1320
        %v1513 = vpop.f32.mrb[0].mxu0
        %v1514 = vadd.f32 %v1326, %v1513
        %v1515 = vpop.f32.mrb[0].mxu0
        %v1516 = vpop.f32.mrb[0].mxu0
        %v1517 = vadd.f32 %v1326, %v1516
        %v1518 = vpop.f32.mrb[0].mxu0
        %1519 = vmatprep.mubr.bf16.mxu0 0
        %1520 = vmatmul.mubr.bf16.gmra.mrb[0].mxu0 %v1321
        %v1521 = vpop.f32.mrb[0].mxu0
        %v1522 = vadd.f32 %v1326, %v1521
        %v1523 = vpop.f32.mrb[0].mxu0
        %v1524 = vpop.f32.mrb[0].mxu0
        %v1525 = vadd.f32 %v1326, %v1524
        %v1526 = vpop.f32.mrb[0].mxu0
        %1527 = vmatprep.mubr.bf16.mxu0 0
        %1528 = vmatmul.mubr.bf16.gmra.mrb[0].mxu0 %v1322
        %v1529 = vpop.f32.mrb[0].mxu0
        %v1530 = vadd.f32 %v1326, %v1529
        %v1531 = vpop.f32.mrb[0].mxu0
        %v1532 = vpop.f32.mrb[0].mxu0
        %v1533 = vadd.f32 %v1326, %v1532
        %v1534 = vpop.f32.mrb[0].mxu0
        %1535 = vdwg.mxu0
        %v1536 = vmax.f32 %v1410, 0.0
        %v1537 = vmax.f32 %v1413, 0.0
        %v1538 = vmax.f32 %v1418, 0.0
        %v1539 = vmax.f32 %v1421, 0.0
        %v1540 = vmax.f32 %v1426, 0.0
        %v1541 = vmax.f32 %v1429, 0.0
        %v1542 = vmax.f32 %v1434, 0.0
        %v1543 = vmax.f32 %v1437, 0.0
        %v1544 = vmax.f32 %v1442, 0.0
        %v1545 = vmax.f32 %v1445, 0.0
        %v1546 = vmax.f32 %v1450, 0.0
        %v1547 = vmax.f32 %v1453, 0.0
        %v1548 = vmax.f32 %v1458, 0.0
        %v1549 = vmax.f32 %v1461, 0.0
        %v1550 = vmax.f32 %v1466, 0.0
        %v1551 = vmax.f32 %v1469, 0.0
        %v1552 = vmax.f32 %v1474, 0.0
        %v1553 = vmax.f32 %v1477, 0.0
        %v1554 = vmax.f32 %v1482, 0.0
        %v1555 = vmax.f32 %v1485, 0.0
        %v1556 = vmax.f32 %v1490, 0.0
        %v1557 = vmax.f32 %v1493, 0.0
        %v1558 = vmax.f32 %v1498, 0.0
        %v1559 = vmax.f32 %v1501, 0.0
        %v1560 = vmax.f32 %v1506, 0.0
        %v1561 = vmax.f32 %v1509, 0.0
        %v1562 = vmax.f32 %v1514, 0.0
        %v1563 = vmax.f32 %v1517, 0.0
        %v1564 = vmax.f32 %v1522, 0.0
        %v1565 = vmax.f32 %v1525, 0.0
        %v1566 = vmax.f32 %v1530, 0.0
        %v1567 = vmax.f32 %v1533, 0.0
        %v1568 = vpack.c.bf16 %v1537, %v1536
        %v1569 = vpack.c.bf16 %v1539, %v1538
        %v1570 = vpack.c.bf16 %v1541, %v1540
        %v1571 = vpack.c.bf16 %v1543, %v1542
        %v1572 = vpack.c.bf16 %v1545, %v1544
        %v1573 = vpack.c.bf16 %v1547, %v1546
        %v1574 = vpack.c.bf16 %v1549, %v1548
        %v1575 = vpack.c.bf16 %v1551, %v1550
        %v1576 = vpack.c.bf16 %v1553, %v1552
        %v1577 = vpack.c.bf16 %v1555, %v1554
        %v1578 = vpack.c.bf16 %v1557, %v1556
        %v1579 = vpack.c.bf16 %v1559, %v1558
        %v1580 = vpack.c.bf16 %v1561, %v1560
        %v1581 = vpack.c.bf16 %v1563, %v1562
        %v1582 = vpack.c.bf16 %v1565, %v1564
        %v1583 = vpack.c.bf16 %v1567, %v1566
        %v1584 = vlaneseq
        %v1585 = vshrl.u32 %v1584, 7
        %v1586 = vsub.s32 0, %v1585
        %v1587 = vrot.slane %v1305, %v1586
        %v1604 = vunpack.c.l.b16 %v1271
        %v1605 = vunpack.c.l.b16 %v1272
        %v1606 = vunpack.c.l.b16 %v1273
        %v1607 = vunpack.c.l.b16 %v1274
        %v1608 = vunpack.c.l.b16 %v1275
        %v1609 = vunpack.c.l.b16 %v1276
        %v1610 = vunpack.c.l.b16 %v1277
        %v1611 = vunpack.c.l.b16 %v1278
        %v1612 = vunpack.c.l.b16 %v1279
        %v1613 = vunpack.c.l.b16 %v1280
        %v1614 = vunpack.c.l.b16 %v1281
        %v1615 = vunpack.c.l.b16 %v1282
        %v1616 = vunpack.c.l.b16 %v1283
        %v1617 = vunpack.c.l.b16 %v1284
        %v1618 = vunpack.c.l.b16 %v1285
        %v1619 = vunpack.c.l.b16 %v1286
        %v1620 = vpack.c.b16 %v1605, %v1604
        %v1621 = vpack.c.b16 %v1607, %v1606
        %v1622 = vpack.c.b16 %v1609, %v1608
        %v1623 = vpack.c.b16 %v1611, %v1610
        %v1624 = vpack.c.b16 %v1613, %v1612
        %v1625 = vpack.c.b16 %v1615, %v1614
        %v1626 = vpack.c.b16 %v1617, %v1616
        %v1627 = vpack.c.b16 %v1619, %v1618
        %1636 = vmatprep.subr.bf16.mxu0 0
        %1637 = vmatpush1.bf16.msra.mxu0 %v1620
        %1638 = vmatprep.subr.bf16.mxu0 0
        %1639 = vmatpush1.bf16.msra.mxu0 %v1621
        %1640 = vmatprep.subr.bf16.mxu0 0
        %1641 = vmatpush1.bf16.msra.mxu0 %v1622
        %1642 = vmatprep.subr.bf16.mxu0 0
        %1643 = vmatpush1.bf16.msra.mxu0 %v1623
        %1644 = vmatprep.subr.bf16.mxu0 0
        %1645 = vmatpush1.bf16.msra.mxu0 %v1624
        %1646 = vmatprep.subr.bf16.mxu0 0
        %1647 = vmatpush1.bf16.msra.mxu0 %v1625
        %1648 = vmatprep.subr.bf16.mxu0 0
        %1649 = vmatpush1.bf16.msra.mxu0 %v1626
        %1650 = vmatprep.subr.bf16.mxu0 0
        %1651 = vmatpush1.bf16.msra.mxu0 %v1627
        %1652 = vmatprep.subr.bf16.mxu0 0
        %1653 = vmatpush1.bf16.msra.mxu0 0
        %1654 = vmatprep.subr.bf16.mxu0 0
        %1655 = vmatpush1.bf16.msra.mxu0 0
        %1656 = vmatprep.subr.bf16.mxu0 0
        %1657 = vmatpush1.bf16.msra.mxu0 0
        %1658 = vmatprep.subr.bf16.mxu0 0
        %1659 = vmatpush1.bf16.msra.mxu0 0
        %1660 = vmatprep.subr.bf16.mxu0 0
        %1661 = vmatpush1.bf16.msra.mxu0 0
        %1662 = vmatprep.subr.bf16.mxu0 0
        %1663 = vmatpush1.bf16.msra.mxu0 0
        %1664 = vmatprep.subr.bf16.mxu0 0
        %1665 = vmatpush1.bf16.msra.mxu0 0
        %1666 = vmatprep.subr.bf16.mxu0 0
        %1667 = vmatpush1.bf16.msra.mxu0 0
        %1668 = vmatprep.mubr.bf16.mxu0 0
        %1669 = vmatmul.mubr.bf16.gmra.mrb[0].mxu0 %v1568
        %v1670 = vpop.f32.mrb[0].mxu0
        %v1671 = vadd.f32 %v1587, %v1670
        %v1672 = vpop.f32.mrb[0].mxu0
        %v1673 = vpop.f32.mrb[0].mxu0
        %v1674 = vadd.f32 %v1587, %v1673
        %v1675 = vpop.f32.mrb[0].mxu0
        %1676 = vmatprep.mubr.bf16.mxu0 0
        %1677 = vmatmul.mubr.bf16.gmra.mrb[0].mxu0 %v1569
        %v1678 = vpop.f32.mrb[0].mxu0
        %v1679 = vadd.f32 %v1587, %v1678
        %v1680 = vpop.f32.mrb[0].mxu0
        %v1681 = vpop.f32.mrb[0].mxu0
        %v1682 = vadd.f32 %v1587, %v1681
        %v1683 = vpop.f32.mrb[0].mxu0
        %1684 = vmatprep.mubr.bf16.mxu0 0
        %1685 = vmatmul.mubr.bf16.gmra.mrb[0].mxu0 %v1570
        %v1686 = vpop.f32.mrb[0].mxu0
        %v1687 = vadd.f32 %v1587, %v1686
        %v1688 = vpop.f32.mrb[0].mxu0
        %v1689 = vpop.f32.mrb[0].mxu0
        %v1690 = vadd.f32 %v1587, %v1689
        %v1691 = vpop.f32.mrb[0].mxu0
        %1692 = vmatprep.mubr.bf16.mxu0 0
        %1693 = vmatmul.mubr.bf16.gmra.mrb[0].mxu0 %v1571
        %v1694 = vpop.f32.mrb[0].mxu0
        %v1695 = vadd.f32 %v1587, %v1694
        %v1696 = vpop.f32.mrb[0].mxu0
        %v1697 = vpop.f32.mrb[0].mxu0
        %v1698 = vadd.f32 %v1587, %v1697
        %v1699 = vpop.f32.mrb[0].mxu0
        %1700 = vmatprep.mubr.bf16.mxu0 0
        %1701 = vmatmul.mubr.bf16.gmra.mrb[0].mxu0 %v1572
        %v1702 = vpop.f32.mrb[0].mxu0
        %v1703 = vadd.f32 %v1587, %v1702
        %v1704 = vpop.f32.mrb[0].mxu0
        %v1705 = vpop.f32.mrb[0].mxu0
        %v1706 = vadd.f32 %v1587, %v1705
        %v1707 = vpop.f32.mrb[0].mxu0
        %1708 = vmatprep.mubr.bf16.mxu0 0
        %1709 = vmatmul.mubr.bf16.gmra.mrb[0].mxu0 %v1573
        %v1710 = vpop.f32.mrb[0].mxu0
        %v1711 = vadd.f32 %v1587, %v1710
        %v1712 = vpop.f32.mrb[0].mxu0
        %v1713 = vpop.f32.mrb[0].mxu0
        %v1714 = vadd.f32 %v1587, %v1713
        %v1715 = vpop.f32.mrb[0].mxu0
        %1716 = vmatprep.mubr.bf16.mxu0 0
        %1717 = vmatmul.mubr.bf16.gmra.mrb[0].mxu0 %v1574
        %v1718 = vpop.f32.mrb[0].mxu0
        %v1719 = vadd.f32 %v1587, %v1718
        %v1720 = vpop.f32.mrb[0].mxu0
        %v1721 = vpop.f32.mrb[0].mxu0
        %v1722 = vadd.f32 %v1587, %v1721
        %v1723 = vpop.f32.mrb[0].mxu0
        %1724 = vmatprep.mubr.bf16.mxu0 0
        %1725 = vmatmul.mubr.bf16.gmra.mrb[0].mxu0 %v1575
        %v1726 = vpop.f32.mrb[0].mxu0
        %v1727 = vadd.f32 %v1587, %v1726
        %v1728 = vpop.f32.mrb[0].mxu0
        %v1729 = vpop.f32.mrb[0].mxu0
        %v1730 = vadd.f32 %v1587, %v1729
        %v1731 = vpop.f32.mrb[0].mxu0
        %1732 = vmatprep.mubr.bf16.mxu0 0
        %1733 = vmatmul.mubr.bf16.gmra.mrb[0].mxu0 %v1576
        %v1734 = vpop.f32.mrb[0].mxu0
        %v1735 = vadd.f32 %v1587, %v1734
        %v1736 = vpop.f32.mrb[0].mxu0
        %v1737 = vpop.f32.mrb[0].mxu0
        %v1738 = vadd.f32 %v1587, %v1737
        %v1739 = vpop.f32.mrb[0].mxu0
        %1740 = vmatprep.mubr.bf16.mxu0 0
        %1741 = vmatmul.mubr.bf16.gmra.mrb[0].mxu0 %v1577
        %v1742 = vpop.f32.mrb[0].mxu0
        %v1743 = vadd.f32 %v1587, %v1742
        %v1744 = vpop.f32.mrb[0].mxu0
        %v1745 = vpop.f32.mrb[0].mxu0
        %v1746 = vadd.f32 %v1587, %v1745
        %v1747 = vpop.f32.mrb[0].mxu0
        %1748 = vmatprep.mubr.bf16.mxu0 0
        %1749 = vmatmul.mubr.bf16.gmra.mrb[0].mxu0 %v1578
        %v1750 = vpop.f32.mrb[0].mxu0
        %v1751 = vadd.f32 %v1587, %v1750
        %v1752 = vpop.f32.mrb[0].mxu0
        %v1753 = vpop.f32.mrb[0].mxu0
        %v1754 = vadd.f32 %v1587, %v1753
        %v1755 = vpop.f32.mrb[0].mxu0
        %1756 = vmatprep.mubr.bf16.mxu0 0
        %1757 = vmatmul.mubr.bf16.gmra.mrb[0].mxu0 %v1579
        %v1758 = vpop.f32.mrb[0].mxu0
        %v1759 = vadd.f32 %v1587, %v1758
        %v1760 = vpop.f32.mrb[0].mxu0
        %v1761 = vpop.f32.mrb[0].mxu0
        %v1762 = vadd.f32 %v1587, %v1761
        %v1763 = vpop.f32.mrb[0].mxu0
        %1764 = vmatprep.mubr.bf16.mxu0 0
        %1765 = vmatmul.mubr.bf16.gmra.mrb[0].mxu0 %v1580
        %v1766 = vpop.f32.mrb[0].mxu0
        %v1767 = vadd.f32 %v1587, %v1766
        %v1768 = vpop.f32.mrb[0].mxu0
        %v1769 = vpop.f32.mrb[0].mxu0
        %v1770 = vadd.f32 %v1587, %v1769
        %v1771 = vpop.f32.mrb[0].mxu0
        %1772 = vmatprep.mubr.bf16.mxu0 0
        %1773 = vmatmul.mubr.bf16.gmra.mrb[0].mxu0 %v1581
        %v1774 = vpop.f32.mrb[0].mxu0
        %v1775 = vadd.f32 %v1587, %v1774
        %v1776 = vpop.f32.mrb[0].mxu0
        %v1777 = vpop.f32.mrb[0].mxu0
        %v1778 = vadd.f32 %v1587, %v1777
        %v1779 = vpop.f32.mrb[0].mxu0
        %1780 = vmatprep.mubr.bf16.mxu0 0
        %1781 = vmatmul.mubr.bf16.gmra.mrb[0].mxu0 %v1582
        %v1782 = vpop.f32.mrb[0].mxu0
        %v1783 = vadd.f32 %v1587, %v1782
        %v1784 = vpop.f32.mrb[0].mxu0
        %v1785 = vpop.f32.mrb[0].mxu0
        %v1786 = vadd.f32 %v1587, %v1785
        %v1787 = vpop.f32.mrb[0].mxu0
        %1788 = vmatprep.mubr.bf16.mxu0 0
        %1789 = vmatmul.mubr.bf16.gmra.mrb[0].mxu0 %v1583
        %v1790 = vpop.f32.mrb[0].mxu0
        %v1791 = vadd.f32 %v1587, %v1790
        %v1792 = vpop.f32.mrb[0].mxu0
        %v1793 = vpop.f32.mrb[0].mxu0
        %v1794 = vadd.f32 %v1587, %v1793
        %v1795 = vpop.f32.mrb[0].mxu0
        %1796 = vdwg.mxu0
        %v1797 = vmax.f32 %v1671, 0.0
        %v1798 = vmax.f32 %v1674, 0.0
        %v1799 = vmax.f32 %v1679, 0.0
        %v1800 = vmax.f32 %v1682, 0.0
        %v1801 = vmax.f32 %v1687, 0.0
        %v1802 = vmax.f32 %v1690, 0.0
        %v1803 = vmax.f32 %v1695, 0.0
        %v1804 = vmax.f32 %v1698, 0.0
        %v1805 = vmax.f32 %v1703, 0.0
        %v1806 = vmax.f32 %v1706, 0.0
        %v1807 = vmax.f32 %v1711, 0.0
        %v1808 = vmax.f32 %v1714, 0.0
        %v1809 = vmax.f32 %v1719, 0.0
        %v1810 = vmax.f32 %v1722, 0.0
        %v1811 = vmax.f32 %v1727, 0.0
        %v1812 = vmax.f32 %v1730, 0.0
        %v1813 = vmax.f32 %v1735, 0.0
        %v1814 = vmax.f32 %v1738, 0.0
        %v1815 = vmax.f32 %v1743, 0.0
        %v1816 = vmax.f32 %v1746, 0.0
        %v1817 = vmax.f32 %v1751, 0.0
        %v1818 = vmax.f32 %v1754, 0.0
        %v1819 = vmax.f32 %v1759, 0.0
        %v1820 = vmax.f32 %v1762, 0.0
        %v1821 = vmax.f32 %v1767, 0.0
        %v1822 = vmax.f32 %v1770, 0.0
        %v1823 = vmax.f32 %v1775, 0.0
        %v1824 = vmax.f32 %v1778, 0.0
        %v1825 = vmax.f32 %v1783, 0.0
        %v1826 = vmax.f32 %v1786, 0.0
        %v1827 = vmax.f32 %v1791, 0.0
        %v1828 = vmax.f32 %v1794, 0.0
        %v1829 = vpack.c.bf16 %v1798, %v1797
        %v1830 = vpack.c.bf16 %v1800, %v1799
        %v1831 = vpack.c.bf16 %v1802, %v1801
        %v1832 = vpack.c.bf16 %v1804, %v1803
        %v1833 = vpack.c.bf16 %v1806, %v1805
        %v1834 = vpack.c.bf16 %v1808, %v1807
        %v1835 = vpack.c.bf16 %v1810, %v1809
        %v1836 = vpack.c.bf16 %v1812, %v1811
        %v1837 = vpack.c.bf16 %v1814, %v1813
        %v1838 = vpack.c.bf16 %v1816, %v1815
        %v1839 = vpack.c.bf16 %v1818, %v1817
        %v1840 = vpack.c.bf16 %v1820, %v1819
        %v1841 = vpack.c.bf16 %v1822, %v1821
        %v1842 = vpack.c.bf16 %v1824, %v1823
        %v1843 = vpack.c.bf16 %v1826, %v1825
        %v1844 = vpack.c.bf16 %v1828, %v1827
        %v1845 = vlaneseq
        %v1846 = vshrl.u32 %v1845, 7
        %v1847 = vsub.s32 0, %v1846
        %v1848 = vrot.slane %v1306, %v1847
        %v1865 = vunpack.c.l.b16 %v1288
        %v1866 = vunpack.c.l.b16 %v1289
        %v1867 = vunpack.c.l.b16 %v1290
        %v1868 = vunpack.c.l.b16 %v1291
        %v1869 = vunpack.c.l.b16 %v1292
        %v1870 = vunpack.c.l.b16 %v1293
        %v1871 = vunpack.c.l.b16 %v1294
        %v1872 = vunpack.c.l.b16 %v1295
        %v1873 = vunpack.c.l.b16 %v1296
        %v1874 = vunpack.c.l.b16 %v1297
        %v1875 = vunpack.c.l.b16 %v1298
        %v1876 = vunpack.c.l.b16 %v1299
        %v1877 = vunpack.c.l.b16 %v1300
        %v1878 = vunpack.c.l.b16 %v1301
        %v1879 = vunpack.c.l.b16 %v1302
        %v1880 = vunpack.c.l.b16 %v1303
        %v1881 = vpack.c.b16 %v1866, %v1865
        %v1882 = vpack.c.b16 %v1868, %v1867
        %v1883 = vpack.c.b16 %v1870, %v1869
        %v1884 = vpack.c.b16 %v1872, %v1871
        %v1885 = vpack.c.b16 %v1874, %v1873
        %v1886 = vpack.c.b16 %v1876, %v1875
        %v1887 = vpack.c.b16 %v1878, %v1877
        %v1888 = vpack.c.b16 %v1880, %v1879
        %1897 = vmatprep.subr.bf16.mxu0 0
        %1898 = vmatpush1.bf16.msra.mxu0 %v1881
        %1899 = vmatprep.subr.bf16.mxu0 0
        %1900 = vmatpush1.bf16.msra.mxu0 %v1882
        %1901 = vmatprep.subr.bf16.mxu0 0
        %1902 = vmatpush1.bf16.msra.mxu0 %v1883
        %1903 = vmatprep.subr.bf16.mxu0 0
        %1904 = vmatpush1.bf16.msra.mxu0 %v1884
        %1905 = vmatprep.subr.bf16.mxu0 0
        %1906 = vmatpush1.bf16.msra.mxu0 %v1885
        %1907 = vmatprep.subr.bf16.mxu0 0
        %1908 = vmatpush1.bf16.msra.mxu0 %v1886
        %1909 = vmatprep.subr.bf16.mxu0 0
        %1910 = vmatpush1.bf16.msra.mxu0 %v1887
        %1911 = vmatprep.subr.bf16.mxu0 0
        %1912 = vmatpush1.bf16.msra.mxu0 %v1888
        %1913 = vmatprep.subr.bf16.mxu0 0
        %1914 = vmatpush1.bf16.msra.mxu0 0
        %1915 = vmatprep.subr.bf16.mxu0 0
        %1916 = vmatpush1.bf16.msra.mxu0 0
        %1917 = vmatprep.subr.bf16.mxu0 0
        %1918 = vmatpush1.bf16.msra.mxu0 0
        %1919 = vmatprep.subr.bf16.mxu0 0
        %1920 = vmatpush1.bf16.msra.mxu0 0
        %1921 = vmatprep.subr.bf16.mxu0 0
        %1922 = vmatpush1.bf16.msra.mxu0 0
        %1923 = vmatprep.subr.bf16.mxu0 0
        %1924 = vmatpush1.bf16.msra.mxu0 0
        %1925 = vmatprep.subr.bf16.mxu0 0
        %1926 = vmatpush1.bf16.msra.mxu0 0
        %1927 = vmatprep.subr.bf16.mxu0 0
        %1928 = vmatpush1.bf16.msra.mxu0 0
        %1929 = vmatprep.mubr.bf16.mxu0 0
        %1930 = vmatmul.mubr.bf16.gmra.mrb[0].mxu0 %v1829
        %v1931 = vpop.f32.mrb[0].mxu0
        %v1932 = vadd.f32 %v1848, %v1931
        %v1933 = vpop.f32.mrb[0].mxu0
        %v1934 = vpop.f32.mrb[0].mxu0
        %v1935 = vadd.f32 %v1848, %v1934
        %v1936 = vpop.f32.mrb[0].mxu0
        %1937 = vmatprep.mubr.bf16.mxu0 0
        %1938 = vmatmul.mubr.bf16.gmra.mrb[0].mxu0 %v1830
        %v1939 = vpop.f32.mrb[0].mxu0
        %v1940 = vadd.f32 %v1848, %v1939
        %v1941 = vpop.f32.mrb[0].mxu0
        %v1942 = vpop.f32.mrb[0].mxu0
        %v1943 = vadd.f32 %v1848, %v1942
        %v1944 = vpop.f32.mrb[0].mxu0
        %1945 = vmatprep.mubr.bf16.mxu0 0
        %1946 = vmatmul.mubr.bf16.gmra.mrb[0].mxu0 %v1831
        %v1947 = vpop.f32.mrb[0].mxu0
        %v1948 = vadd.f32 %v1848, %v1947
        %v1949 = vpop.f32.mrb[0].mxu0
        %v1950 = vpop.f32.mrb[0].mxu0
        %v1951 = vadd.f32 %v1848, %v1950
        %v1952 = vpop.f32.mrb[0].mxu0
        %1953 = vmatprep.mubr.bf16.mxu0 0
        %1954 = vmatmul.mubr.bf16.gmra.mrb[0].mxu0 %v1832
        %v1955 = vpop.f32.mrb[0].mxu0
        %v1956 = vadd.f32 %v1848, %v1955
        %v1957 = vpop.f32.mrb[0].mxu0
        %v1958 = vpop.f32.mrb[0].mxu0
        %v1959 = vadd.f32 %v1848, %v1958
        %v1960 = vpop.f32.mrb[0].mxu0
        %1961 = vmatprep.mubr.bf16.mxu0 0
        %1962 = vmatmul.mubr.bf16.gmra.mrb[0].mxu0 %v1833
        %v1963 = vpop.f32.mrb[0].mxu0
        %v1964 = vadd.f32 %v1848, %v1963
        %v1965 = vpop.f32.mrb[0].mxu0
        %v1966 = vpop.f32.mrb[0].mxu0
        %v1967 = vadd.f32 %v1848, %v1966
        %v1968 = vpop.f32.mrb[0].mxu0
        %1969 = vmatprep.mubr.bf16.mxu0 0
        %1970 = vmatmul.mubr.bf16.gmra.mrb[0].mxu0 %v1834
        %v1971 = vpop.f32.mrb[0].mxu0
        %v1972 = vadd.f32 %v1848, %v1971
        %v1973 = vpop.f32.mrb[0].mxu0
        %v1974 = vpop.f32.mrb[0].mxu0
        %v1975 = vadd.f32 %v1848, %v1974
        %v1976 = vpop.f32.mrb[0].mxu0
        %1977 = vmatprep.mubr.bf16.mxu0 0
        %1978 = vmatmul.mubr.bf16.gmra.mrb[0].mxu0 %v1835
        %v1979 = vpop.f32.mrb[0].mxu0
        %v1980 = vadd.f32 %v1848, %v1979
        %v1981 = vpop.f32.mrb[0].mxu0
        %v1982 = vpop.f32.mrb[0].mxu0
        %v1983 = vadd.f32 %v1848, %v1982
        %v1984 = vpop.f32.mrb[0].mxu0
        %1985 = vmatprep.mubr.bf16.mxu0 0
        %1986 = vmatmul.mubr.bf16.gmra.mrb[0].mxu0 %v1836
        %v1987 = vpop.f32.mrb[0].mxu0
        %v1988 = vadd.f32 %v1848, %v1987
        %v1989 = vpop.f32.mrb[0].mxu0
        %v1990 = vpop.f32.mrb[0].mxu0
        %v1991 = vadd.f32 %v1848, %v1990
        %v1992 = vpop.f32.mrb[0].mxu0
        %1993 = vmatprep.mubr.bf16.mxu0 0
        %1994 = vmatmul.mubr.bf16.gmra.mrb[0].mxu0 %v1837
        %v1995 = vpop.f32.mrb[0].mxu0
        %v1996 = vadd.f32 %v1848, %v1995
        %v1997 = vpop.f32.mrb[0].mxu0
        %v1998 = vpop.f32.mrb[0].mxu0
        %v1999 = vadd.f32 %v1848, %v1998
        %v2000 = vpop.f32.mrb[0].mxu0
        %2001 = vmatprep.mubr.bf16.mxu0 0
        %2002 = vmatmul.mubr.bf16.gmra.mrb[0].mxu0 %v1838
        %v2003 = vpop.f32.mrb[0].mxu0
        %v2004 = vadd.f32 %v1848, %v2003
        %v2005 = vpop.f32.mrb[0].mxu0
        %v2006 = vpop.f32.mrb[0].mxu0
        %v2007 = vadd.f32 %v1848, %v2006
        %v2008 = vpop.f32.mrb[0].mxu0
        %2009 = vmatprep.mubr.bf16.mxu0 0
        %2010 = vmatmul.mubr.bf16.gmra.mrb[0].mxu0 %v1839
        %v2011 = vpop.f32.mrb[0].mxu0
        %v2012 = vadd.f32 %v1848, %v2011
        %v2013 = vpop.f32.mrb[0].mxu0
        %v2014 = vpop.f32.mrb[0].mxu0
        %v2015 = vadd.f32 %v1848, %v2014
        %v2016 = vpop.f32.mrb[0].mxu0
        %2017 = vmatprep.mubr.bf16.mxu0 0
        %2018 = vmatmul.mubr.bf16.gmra.mrb[0].mxu0 %v1840
        %v2019 = vpop.f32.mrb[0].mxu0
        %v2020 = vadd.f32 %v1848, %v2019
        %v2021 = vpop.f32.mrb[0].mxu0
        %v2022 = vpop.f32.mrb[0].mxu0
        %v2023 = vadd.f32 %v1848, %v2022
        %v2024 = vpop.f32.mrb[0].mxu0
        %2025 = vmatprep.mubr.bf16.mxu0 0
        %2026 = vmatmul.mubr.bf16.gmra.mrb[0].mxu0 %v1841
        %v2027 = vpop.f32.mrb[0].mxu0
        %v2028 = vadd.f32 %v1848, %v2027
        %v2029 = vpop.f32.mrb[0].mxu0
        %v2030 = vpop.f32.mrb[0].mxu0
        %v2031 = vadd.f32 %v1848, %v2030
        %v2032 = vpop.f32.mrb[0].mxu0
        %2033 = vmatprep.mubr.bf16.mxu0 0
        %2034 = vmatmul.mubr.bf16.gmra.mrb[0].mxu0 %v1842
        %v2035 = vpop.f32.mrb[0].mxu0
        %v2036 = vadd.f32 %v1848, %v2035
        %v2037 = vpop.f32.mrb[0].mxu0
        %v2038 = vpop.f32.mrb[0].mxu0
        %v2039 = vadd.f32 %v1848, %v2038
        %v2040 = vpop.f32.mrb[0].mxu0
        %2041 = vmatprep.mubr.bf16.mxu0 0
        %2042 = vmatmul.mubr.bf16.gmra.mrb[0].mxu0 %v1843
        %v2043 = vpop.f32.mrb[0].mxu0
        %v2044 = vadd.f32 %v1848, %v2043
        %v2045 = vpop.f32.mrb[0].mxu0
        %v2046 = vpop.f32.mrb[0].mxu0
        %v2047 = vadd.f32 %v1848, %v2046
        %v2048 = vpop.f32.mrb[0].mxu0
        %2049 = vmatprep.mubr.bf16.mxu0 0
        %2050 = vmatmul.mubr.bf16.gmra.mrb[0].mxu0 %v1844
        %v2051 = vpop.f32.mrb[0].mxu0
        %v2052 = vadd.f32 %v1848, %v2051
        %v2053 = vpop.f32.mrb[0].mxu0
        %v2054 = vpop.f32.mrb[0].mxu0
        %v2055 = vadd.f32 %v1848, %v2054
        %v2056 = vpop.f32.mrb[0].mxu0
        %2057 = vdwg.mxu0
        %v2058 = vadd.f32 %v1221, %v1932
        %v2059 = vadd.f32 %v1222, %v1935
        %v2060 = vadd.f32 %v1223, %v1940
        %v2061 = vadd.f32 %v1224, %v1943
        %v2062 = vadd.f32 %v1225, %v1948
        %v2063 = vadd.f32 %v1226, %v1951
        %v2064 = vadd.f32 %v1227, %v1956
        %v2065 = vadd.f32 %v1228, %v1959
        %v2066 = vadd.f32 %v1229, %v1964
        %v2067 = vadd.f32 %v1230, %v1967
        %v2068 = vadd.f32 %v1231, %v1972
        %v2069 = vadd.f32 %v1232, %v1975
        %v2070 = vadd.f32 %v1233, %v1980
        %v2071 = vadd.f32 %v1234, %v1983
        %v2072 = vadd.f32 %v1235, %v1988
        %v2073 = vadd.f32 %v1236, %v1991
        %v2074 = vadd.f32 %v1237, %v1996
        %v2075 = vadd.f32 %v1238, %v1999
        %v2076 = vadd.f32 %v1239, %v2004
        %v2077 = vadd.f32 %v1240, %v2007
        %v2078 = vadd.f32 %v1241, %v2012
        %v2079 = vadd.f32 %v1242, %v2015
        %v2080 = vadd.f32 %v1243, %v2020
        %v2081 = vadd.f32 %v1244, %v2023
        %v2082 = vadd.f32 %v1245, %v2028
        %v2083 = vadd.f32 %v1246, %v2031
        %v2084 = vadd.f32 %v1247, %v2036
        %v2085 = vadd.f32 %v1248, %v2039
        %v2086 = vadd.f32 %v1249, %v2044
        %v2087 = vadd.f32 %v1250, %v2047
        %v2088 = vadd.f32 %v1251, %v2052
        %v2089 = vadd.f32 %v1252, %v2055
        %2090 = vadd.xlane.f32.xlu0 %v2058
        %v2091 = vpop.xlane.xlu0 %2090
        %2092 = vadd.xlane.f32.xlu0 %v2059
        %v2093 = vpop.xlane.xlu0 %2092
        %2094 = vadd.xlane.f32.xlu0 %v2060
        %v2095 = vpop.xlane.xlu0 %2094
        %2096 = vadd.xlane.f32.xlu0 %v2061
        %v2097 = vpop.xlane.xlu0 %2096
        %2098 = vadd.xlane.f32.xlu0 %v2062
        %v2099 = vpop.xlane.xlu0 %2098
        %2100 = vadd.xlane.f32.xlu0 %v2063
        %v2101 = vpop.xlane.xlu0 %2100
        %2102 = vadd.xlane.f32.xlu0 %v2064
        %v2103 = vpop.xlane.xlu0 %2102
        %2104 = vadd.xlane.f32.xlu0 %v2065
        %v2105 = vpop.xlane.xlu0 %2104
        %2106 = vadd.xlane.f32.xlu0 %v2066
        %v2107 = vpop.xlane.xlu0 %2106
        %2108 = vadd.xlane.f32.xlu0 %v2067
        %v2109 = vpop.xlane.xlu0 %2108
        %2110 = vadd.xlane.f32.xlu0 %v2068
        %v2111 = vpop.xlane.xlu0 %2110
        %2112 = vadd.xlane.f32.xlu0 %v2069
        %v2113 = vpop.xlane.xlu0 %2112
        %2114 = vadd.xlane.f32.xlu0 %v2070
        %v2115 = vpop.xlane.xlu0 %2114
        %2116 = vadd.xlane.f32.xlu0 %v2071
        %v2117 = vpop.xlane.xlu0 %2116
        %2118 = vadd.xlane.f32.xlu0 %v2072
        %v2119 = vpop.xlane.xlu0 %2118
        %2120 = vadd.xlane.f32.xlu0 %v2073
        %v2121 = vpop.xlane.xlu0 %2120
        %2122 = vadd.xlane.f32.xlu0 %v2074
        %v2123 = vpop.xlane.xlu0 %2122
        %2124 = vadd.xlane.f32.xlu0 %v2075
        %v2125 = vpop.xlane.xlu0 %2124
        %2126 = vadd.xlane.f32.xlu0 %v2076
        %v2127 = vpop.xlane.xlu0 %2126
        %2128 = vadd.xlane.f32.xlu0 %v2077
        %v2129 = vpop.xlane.xlu0 %2128
        %2130 = vadd.xlane.f32.xlu0 %v2078
        %v2131 = vpop.xlane.xlu0 %2130
        %2132 = vadd.xlane.f32.xlu0 %v2079
        %v2133 = vpop.xlane.xlu0 %2132
        %2134 = vadd.xlane.f32.xlu0 %v2080
        %v2135 = vpop.xlane.xlu0 %2134
        %2136 = vadd.xlane.f32.xlu0 %v2081
        %v2137 = vpop.xlane.xlu0 %2136
        %2138 = vadd.xlane.f32.xlu0 %v2082
        %v2139 = vpop.xlane.xlu0 %2138
        %2140 = vadd.xlane.f32.xlu0 %v2083
        %v2141 = vpop.xlane.xlu0 %2140
        %2142 = vadd.xlane.f32.xlu0 %v2084
        %v2143 = vpop.xlane.xlu0 %2142
        %2144 = vadd.xlane.f32.xlu0 %v2085
        %v2145 = vpop.xlane.xlu0 %2144
        %2146 = vadd.xlane.f32.xlu0 %v2086
        %v2147 = vpop.xlane.xlu0 %2146
        %2148 = vadd.xlane.f32.xlu0 %v2087
        %v2149 = vpop.xlane.xlu0 %2148
        %2150 = vadd.xlane.f32.xlu0 %v2088
        %v2151 = vpop.xlane.xlu0 %2150
        %2152 = vadd.xlane.f32.xlu0 %v2089
        %v2153 = vpop.xlane.xlu0 %2152
        %v2154 = vrcp.pop 128.0
        %v2155 = vmul.f32 %v2091, %v2154
        %v2156 = vmul.f32 %v2093, %v2154
        %v2157 = vmul.f32 %v2095, %v2154
        %v2158 = vmul.f32 %v2097, %v2154
        %v2159 = vmul.f32 %v2099, %v2154
        %v2160 = vmul.f32 %v2101, %v2154
        %v2161 = vmul.f32 %v2103, %v2154
        %v2162 = vmul.f32 %v2105, %v2154
        %v2163 = vmul.f32 %v2107, %v2154
        %v2164 = vmul.f32 %v2109, %v2154
        %v2165 = vmul.f32 %v2111, %v2154
        %v2166 = vmul.f32 %v2113, %v2154
        %v2167 = vmul.f32 %v2115, %v2154
        %v2168 = vmul.f32 %v2117, %v2154
        %v2169 = vmul.f32 %v2119, %v2154
        %v2170 = vmul.f32 %v2121, %v2154
        %v2171 = vmul.f32 %v2123, %v2154
        %v2172 = vmul.f32 %v2125, %v2154
        %v2173 = vmul.f32 %v2127, %v2154
        %v2174 = vmul.f32 %v2129, %v2154
        %v2175 = vmul.f32 %v2131, %v2154
        %v2176 = vmul.f32 %v2133, %v2154
        %v2177 = vmul.f32 %v2135, %v2154
        %v2178 = vmul.f32 %v2137, %v2154
        %v2179 = vmul.f32 %v2139, %v2154
        %v2180 = vmul.f32 %v2141, %v2154
        %v2181 = vmul.f32 %v2143, %v2154
        %v2182 = vmul.f32 %v2145, %v2154
        %v2183 = vmul.f32 %v2147, %v2154
        %v2184 = vmul.f32 %v2149, %v2154
        %v2185 = vmul.f32 %v2151, %v2154
        %v2186 = vmul.f32 %v2153, %v2154
        %v2187 = vsub.f32 %v2058, %v2155
        %v2188 = vsub.f32 %v2059, %v2156
        %v2189 = vsub.f32 %v2060, %v2157
        %v2190 = vsub.f32 %v2061, %v2158
        %v2191 = vsub.f32 %v2062, %v2159
        %v2192 = vsub.f32 %v2063, %v2160
        %v2193 = vsub.f32 %v2064, %v2161
        %v2194 = vsub.f32 %v2065, %v2162
        %v2195 = vsub.f32 %v2066, %v2163
        %v2196 = vsub.f32 %v2067, %v2164
        %v2197 = vsub.f32 %v2068, %v2165
        %v2198 = vsub.f32 %v2069, %v2166
        %v2199 = vsub.f32 %v2070, %v2167
        %v2200 = vsub.f32 %v2071, %v2168
        %v2201 = vsub.f32 %v2072, %v2169
        %v2202 = vsub.f32 %v2073, %v2170
        %v2203 = vsub.f32 %v2074, %v2171
        %v2204 = vsub.f32 %v2075, %v2172
        %v2205 = vsub.f32 %v2076, %v2173
        %v2206 = vsub.f32 %v2077, %v2174
        %v2207 = vsub.f32 %v2078, %v2175
        %v2208 = vsub.f32 %v2079, %v2176
        %v2209 = vsub.f32 %v2080, %v2177
        %v2210 = vsub.f32 %v2081, %v2178
        %v2211 = vsub.f32 %v2082, %v2179
        %v2212 = vsub.f32 %v2083, %v2180
        %v2213 = vsub.f32 %v2084, %v2181
        %v2214 = vsub.f32 %v2085, %v2182
        %v2215 = vsub.f32 %v2086, %v2183
        %v2216 = vsub.f32 %v2087, %v2184
        %v2217 = vsub.f32 %v2088, %v2185
        %v2218 = vsub.f32 %v2089, %v2186
        %v2219 = vmul.f32 %v2187, %v2187
        %v2220 = vmul.f32 %v2188, %v2188
        %v2221 = vmul.f32 %v2189, %v2189
        %v2222 = vmul.f32 %v2190, %v2190
        %v2223 = vmul.f32 %v2191, %v2191
        %v2224 = vmul.f32 %v2192, %v2192
        %v2225 = vmul.f32 %v2193, %v2193
        %v2226 = vmul.f32 %v2194, %v2194
        %v2227 = vmul.f32 %v2195, %v2195
        %v2228 = vmul.f32 %v2196, %v2196
        %v2229 = vmul.f32 %v2197, %v2197
        %v2230 = vmul.f32 %v2198, %v2198
        %v2231 = vmul.f32 %v2199, %v2199
        %v2232 = vmul.f32 %v2200, %v2200
        %v2233 = vmul.f32 %v2201, %v2201
        %v2234 = vmul.f32 %v2202, %v2202
        %v2235 = vmul.f32 %v2203, %v2203
        %v2236 = vmul.f32 %v2204, %v2204
        %v2237 = vmul.f32 %v2205, %v2205
        %v2238 = vmul.f32 %v2206, %v2206
        %v2239 = vmul.f32 %v2207, %v2207
        %v2240 = vmul.f32 %v2208, %v2208
        %v2241 = vmul.f32 %v2209, %v2209
        %v2242 = vmul.f32 %v2210, %v2210
        %v2243 = vmul.f32 %v2211, %v2211
        %v2244 = vmul.f32 %v2212, %v2212
        %v2245 = vmul.f32 %v2213, %v2213
        %v2246 = vmul.f32 %v2214, %v2214
        %v2247 = vmul.f32 %v2215, %v2215
        %v2248 = vmul.f32 %v2216, %v2216
        %v2249 = vmul.f32 %v2217, %v2217
        %v2250 = vmul.f32 %v2218, %v2218
        %2251 = vadd.xlane.f32.xlu0 %v2219
        %v2252 = vpop.xlane.xlu0 %2251
        %2253 = vadd.xlane.f32.xlu0 %v2220
        %v2254 = vpop.xlane.xlu0 %2253
        %2255 = vadd.xlane.f32.xlu0 %v2221
        %v2256 = vpop.xlane.xlu0 %2255
        %2257 = vadd.xlane.f32.xlu0 %v2222
        %v2258 = vpop.xlane.xlu0 %2257
        %2259 = vadd.xlane.f32.xlu0 %v2223
        %v2260 = vpop.xlane.xlu0 %2259
        %2261 = vadd.xlane.f32.xlu0 %v2224
        %v2262 = vpop.xlane.xlu0 %2261
        %2263 = vadd.xlane.f32.xlu0 %v2225
        %v2264 = vpop.xlane.xlu0 %2263
        %2265 = vadd.xlane.f32.xlu0 %v2226
        %v2266 = vpop.xlane.xlu0 %2265
        %2267 = vadd.xlane.f32.xlu0 %v2227
        %v2268 = vpop.xlane.xlu0 %2267
        %2269 = vadd.xlane.f32.xlu0 %v2228
        %v2270 = vpop.xlane.xlu0 %2269
        %2271 = vadd.xlane.f32.xlu0 %v2229
        %v2272 = vpop.xlane.xlu0 %2271
        %2273 = vadd.xlane.f32.xlu0 %v2230
        %v2274 = vpop.xlane.xlu0 %2273
        %2275 = vadd.xlane.f32.xlu0 %v2231
        %v2276 = vpop.xlane.xlu0 %2275
        %2277 = vadd.xlane.f32.xlu0 %v2232
        %v2278 = vpop.xlane.xlu0 %2277
        %2279 = vadd.xlane.f32.xlu0 %v2233
        %v2280 = vpop.xlane.xlu0 %2279
        %2281 = vadd.xlane.f32.xlu0 %v2234
        %v2282 = vpop.xlane.xlu0 %2281
        %2283 = vadd.xlane.f32.xlu0 %v2235
        %v2284 = vpop.xlane.xlu0 %2283
        %2285 = vadd.xlane.f32.xlu0 %v2236
        %v2286 = vpop.xlane.xlu0 %2285
        %2287 = vadd.xlane.f32.xlu0 %v2237
        %v2288 = vpop.xlane.xlu0 %2287
        %2289 = vadd.xlane.f32.xlu0 %v2238
        %v2290 = vpop.xlane.xlu0 %2289
        %2291 = vadd.xlane.f32.xlu0 %v2239
        %v2292 = vpop.xlane.xlu0 %2291
        %2293 = vadd.xlane.f32.xlu0 %v2240
        %v2294 = vpop.xlane.xlu0 %2293
        %2295 = vadd.xlane.f32.xlu0 %v2241
        %v2296 = vpop.xlane.xlu0 %2295
        %2297 = vadd.xlane.f32.xlu0 %v2242
        %v2298 = vpop.xlane.xlu0 %2297
        %2299 = vadd.xlane.f32.xlu0 %v2243
        %v2300 = vpop.xlane.xlu0 %2299
        %2301 = vadd.xlane.f32.xlu0 %v2244
        %v2302 = vpop.xlane.xlu0 %2301
        %2303 = vadd.xlane.f32.xlu0 %v2245
        %v2304 = vpop.xlane.xlu0 %2303
        %2305 = vadd.xlane.f32.xlu0 %v2246
        %v2306 = vpop.xlane.xlu0 %2305
        %2307 = vadd.xlane.f32.xlu0 %v2247
        %v2308 = vpop.xlane.xlu0 %2307
        %2309 = vadd.xlane.f32.xlu0 %v2248
        %v2310 = vpop.xlane.xlu0 %2309
        %2311 = vadd.xlane.f32.xlu0 %v2249
        %v2312 = vpop.xlane.xlu0 %2311
        %2313 = vadd.xlane.f32.xlu0 %v2250
        %v2314 = vpop.xlane.xlu0 %2313
        %v2315 = vmul.f32 %v2252, %v2154
        %v2316 = vmul.f32 %v2254, %v2154
        %v2317 = vmul.f32 %v2256, %v2154
        %v2318 = vmul.f32 %v2258, %v2154
        %v2319 = vmul.f32 %v2260, %v2154
        %v2320 = vmul.f32 %v2262, %v2154
        %v2321 = vmul.f32 %v2264, %v2154
        %v2322 = vmul.f32 %v2266, %v2154
        %v2323 = vmul.f32 %v2268, %v2154
        %v2324 = vmul.f32 %v2270, %v2154
        %v2325 = vmul.f32 %v2272, %v2154
        %v2326 = vmul.f32 %v2274, %v2154
        %v2327 = vmul.f32 %v2276, %v2154
        %v2328 = vmul.f32 %v2278, %v2154
        %v2329 = vmul.f32 %v2280, %v2154
        %v2330 = vmul.f32 %v2282, %v2154
        %v2331 = vmul.f32 %v2284, %v2154
        %v2332 = vmul.f32 %v2286, %v2154
        %v2333 = vmul.f32 %v2288, %v2154
        %v2334 = vmul.f32 %v2290, %v2154
        %v2335 = vmul.f32 %v2292, %v2154
        %v2336 = vmul.f32 %v2294, %v2154
        %v2337 = vmul.f32 %v2296, %v2154
        %v2338 = vmul.f32 %v2298, %v2154
        %v2339 = vmul.f32 %v2300, %v2154
        %v2340 = vmul.f32 %v2302, %v2154
        %v2341 = vmul.f32 %v2304, %v2154
        %v2342 = vmul.f32 %v2306, %v2154
        %v2343 = vmul.f32 %v2308, %v2154
        %v2344 = vmul.f32 %v2310, %v2154
        %v2345 = vmul.f32 %v2312, %v2154
        %v2346 = vmul.f32 %v2314, %v2154
        %v2347 = vadd.f32 %v2315, 1e-05
        %v2348 = vadd.f32 %v2316, 1e-05
        %v2349 = vadd.f32 %v2317, 1e-05
        %v2350 = vadd.f32 %v2318, 1e-05
        %v2351 = vadd.f32 %v2319, 1e-05
        %v2352 = vadd.f32 %v2320, 1e-05
        %v2353 = vadd.f32 %v2321, 1e-05
        %v2354 = vadd.f32 %v2322, 1e-05
        %v2355 = vadd.f32 %v2323, 1e-05
        %v2356 = vadd.f32 %v2324, 1e-05
        %v2357 = vadd.f32 %v2325, 1e-05
        %v2358 = vadd.f32 %v2326, 1e-05
        %v2359 = vadd.f32 %v2327, 1e-05
        %v2360 = vadd.f32 %v2328, 1e-05
        %v2361 = vadd.f32 %v2329, 1e-05
        %v2362 = vadd.f32 %v2330, 1e-05
        %v2363 = vadd.f32 %v2331, 1e-05
        %v2364 = vadd.f32 %v2332, 1e-05
        %v2365 = vadd.f32 %v2333, 1e-05
        %v2366 = vadd.f32 %v2334, 1e-05
        %v2367 = vadd.f32 %v2335, 1e-05
        %v2368 = vadd.f32 %v2336, 1e-05
        %v2369 = vadd.f32 %v2337, 1e-05
        %v2370 = vadd.f32 %v2338, 1e-05
        %v2371 = vadd.f32 %v2339, 1e-05
        %v2372 = vadd.f32 %v2340, 1e-05
        %v2373 = vadd.f32 %v2341, 1e-05
        %v2374 = vadd.f32 %v2342, 1e-05
        %v2375 = vadd.f32 %v2343, 1e-05
        %v2376 = vadd.f32 %v2344, 1e-05
        %v2377 = vadd.f32 %v2345, 1e-05
        %v2378 = vadd.f32 %v2346, 1e-05
        %v2379 = vrsqrt.pop %v2347
        %v2380 = vrsqrt.pop %v2348
        %v2381 = vrsqrt.pop %v2349
        %v2382 = vrsqrt.pop %v2350
        %v2383 = vrsqrt.pop %v2351
        %v2384 = vrsqrt.pop %v2352
        %v2385 = vrsqrt.pop %v2353
        %v2386 = vrsqrt.pop %v2354
        %v2387 = vrsqrt.pop %v2355
        %v2388 = vrsqrt.pop %v2356
        %v2389 = vrsqrt.pop %v2357
        %v2390 = vrsqrt.pop %v2358
        %v2391 = vrsqrt.pop %v2359
        %v2392 = vrsqrt.pop %v2360
        %v2393 = vrsqrt.pop %v2361
        %v2394 = vrsqrt.pop %v2362
        %v2395 = vrsqrt.pop %v2363
        %v2396 = vrsqrt.pop %v2364
        %v2397 = vrsqrt.pop %v2365
        %v2398 = vrsqrt.pop %v2366
        %v2399 = vrsqrt.pop %v2367
        %v2400 = vrsqrt.pop %v2368
        %v2401 = vrsqrt.pop %v2369
        %v2402 = vrsqrt.pop %v2370
        %v2403 = vrsqrt.pop %v2371
        %v2404 = vrsqrt.pop %v2372
        %v2405 = vrsqrt.pop %v2373
        %v2406 = vrsqrt.pop %v2374
        %v2407 = vrsqrt.pop %v2375
        %v2408 = vrsqrt.pop %v2376
        %v2409 = vrsqrt.pop %v2377
        %v2410 = vrsqrt.pop %v2378
        %v2411 = vmul.f32 %v2187, %v2379
        %v2412 = vmul.f32 %v2188, %v2380
        %v2413 = vmul.f32 %v2189, %v2381
        %v2414 = vmul.f32 %v2190, %v2382
        %v2415 = vmul.f32 %v2191, %v2383
        %v2416 = vmul.f32 %v2192, %v2384
        %v2417 = vmul.f32 %v2193, %v2385
        %v2418 = vmul.f32 %v2194, %v2386
        %v2419 = vmul.f32 %v2195, %v2387
        %v2420 = vmul.f32 %v2196, %v2388
        %v2421 = vmul.f32 %v2197, %v2389
        %v2422 = vmul.f32 %v2198, %v2390
        %v2423 = vmul.f32 %v2199, %v2391
        %v2424 = vmul.f32 %v2200, %v2392
        %v2425 = vmul.f32 %v2201, %v2393
        %v2426 = vmul.f32 %v2202, %v2394
        %v2427 = vmul.f32 %v2203, %v2395
        %v2428 = vmul.f32 %v2204, %v2396
        %v2429 = vmul.f32 %v2205, %v2397
        %v2430 = vmul.f32 %v2206, %v2398
        %v2431 = vmul.f32 %v2207, %v2399
        %v2432 = vmul.f32 %v2208, %v2400
        %v2433 = vmul.f32 %v2209, %v2401
        %v2434 = vmul.f32 %v2210, %v2402
        %v2435 = vmul.f32 %v2211, %v2403
        %v2436 = vmul.f32 %v2212, %v2404
        %v2437 = vmul.f32 %v2213, %v2405
        %v2438 = vmul.f32 %v2214, %v2406
        %v2439 = vmul.f32 %v2215, %v2407
        %v2440 = vmul.f32 %v2216, %v2408
        %v2441 = vmul.f32 %v2217, %v2409
        %v2442 = vmul.f32 %v2218, %v2410
        %v2443 = vld [vmem:[%s3] sm:$0x1]
        %v2445 = vlaneseq
        %v2446 = vshrl.u32 %v2445, 7
        %v2447 = vsub.s32 0, %v2446
        %v2448 = vrot.slane %v2443, %v2447
        %v2450 = vmul.f32 %v2411, %v2448
        %v2451 = vmul.f32 %v2412, %v2448
        %v2452 = vmul.f32 %v2413, %v2448
        %v2453 = vmul.f32 %v2414, %v2448
        %v2454 = vmul.f32 %v2415, %v2448
        %v2455 = vmul.f32 %v2416, %v2448
        %v2456 = vmul.f32 %v2417, %v2448
        %v2457 = vmul.f32 %v2418, %v2448
        %v2458 = vmul.f32 %v2419, %v2448
        %v2459 = vmul.f32 %v2420, %v2448
        %v2460 = vmul.f32 %v2421, %v2448
        %v2461 = vmul.f32 %v2422, %v2448
        %v2462 = vmul.f32 %v2423, %v2448
        %v2463 = vmul.f32 %v2424, %v2448
        %v2464 = vmul.f32 %v2425, %v2448
        %v2465 = vmul.f32 %v2426, %v2448
        %v2466 = vmul.f32 %v2427, %v2448
        %v2467 = vmul.f32 %v2428, %v2448
        %v2468 = vmul.f32 %v2429, %v2448
        %v2469 = vmul.f32 %v2430, %v2448
        %v2470 = vmul.f32 %v2431, %v2448
        %v2471 = vmul.f32 %v2432, %v2448
        %v2472 = vmul.f32 %v2433, %v2448
        %v2473 = vmul.f32 %v2434, %v2448
        %v2474 = vmul.f32 %v2435, %v2448
        %v2475 = vmul.f32 %v2436, %v2448
        %v2476 = vmul.f32 %v2437, %v2448
        %v2477 = vmul.f32 %v2438, %v2448
        %v2478 = vmul.f32 %v2439, %v2448
        %v2479 = vmul.f32 %v2440, %v2448
        %v2480 = vmul.f32 %v2441, %v2448
        %v2481 = vmul.f32 %v2442, %v2448
        %v2482 = vld [vmem:[%s4] sm:$0x1]
        %v2484 = vlaneseq
        %v2485 = vshrl.u32 %v2484, 7
        %v2486 = vsub.s32 0, %v2485
        %v2487 = vrot.slane %v2482, %v2486
        %v2489 = vadd.f32 %v2450, %v2487
        %v2490 = vadd.f32 %v2451, %v2487
        %v2491 = vadd.f32 %v2452, %v2487
        %v2492 = vadd.f32 %v2453, %v2487
        %v2493 = vadd.f32 %v2454, %v2487
        %v2494 = vadd.f32 %v2455, %v2487
        %v2495 = vadd.f32 %v2456, %v2487
        %v2496 = vadd.f32 %v2457, %v2487
        %v2497 = vadd.f32 %v2458, %v2487
        %v2498 = vadd.f32 %v2459, %v2487
        %v2499 = vadd.f32 %v2460, %v2487
        %v2500 = vadd.f32 %v2461, %v2487
        %v2501 = vadd.f32 %v2462, %v2487
        %v2502 = vadd.f32 %v2463, %v2487
        %v2503 = vadd.f32 %v2464, %v2487
        %v2504 = vadd.f32 %v2465, %v2487
        %v2505 = vadd.f32 %v2466, %v2487
        %v2506 = vadd.f32 %v2467, %v2487
        %v2507 = vadd.f32 %v2468, %v2487
        %v2508 = vadd.f32 %v2469, %v2487
        %v2509 = vadd.f32 %v2470, %v2487
        %v2510 = vadd.f32 %v2471, %v2487
        %v2511 = vadd.f32 %v2472, %v2487
        %v2512 = vadd.f32 %v2473, %v2487
        %v2513 = vadd.f32 %v2474, %v2487
        %v2514 = vadd.f32 %v2475, %v2487
        %v2515 = vadd.f32 %v2476, %v2487
        %v2516 = vadd.f32 %v2477, %v2487
        %v2517 = vadd.f32 %v2478, %v2487
        %v2518 = vadd.f32 %v2479, %v2487
        %v2519 = vadd.f32 %v2480, %v2487
        %v2520 = vadd.f32 %v2481, %v2487
        %v2521 = vpack.c.bf16 %v2490, %v2489
        %v2522 = vpack.c.bf16 %v2492, %v2491
        %v2523 = vpack.c.bf16 %v2494, %v2493
        %v2524 = vpack.c.bf16 %v2496, %v2495
        %v2525 = vpack.c.bf16 %v2498, %v2497
        %v2526 = vpack.c.bf16 %v2500, %v2499
        %v2527 = vpack.c.bf16 %v2502, %v2501
        %v2528 = vpack.c.bf16 %v2504, %v2503
        %v2529 = vpack.c.bf16 %v2506, %v2505
        %v2530 = vpack.c.bf16 %v2508, %v2507
        %v2531 = vpack.c.bf16 %v2510, %v2509
        %v2532 = vpack.c.bf16 %v2512, %v2511
        %v2533 = vpack.c.bf16 %v2514, %v2513
        %v2534 = vpack.c.bf16 %v2516, %v2515
        %v2535 = vpack.c.bf16 %v2518, %v2517
        %v2536 = vpack.c.bf16 %v2520, %v2519
        %v2553 = vunpack.c.l.b16 %v2521
        %v2554 = vunpack.c.h.b16 %v2521
        %v2555 = vunpack.c.l.b16 %v2522
        %v2556 = vunpack.c.h.b16 %v2522
        %v2557 = vunpack.c.l.b16 %v2523
        %v2558 = vunpack.c.h.b16 %v2523
        %v2559 = vunpack.c.l.b16 %v2524
        %v2560 = vunpack.c.h.b16 %v2524
        %v2561 = vunpack.c.l.b16 %v2525
        %v2562 = vunpack.c.h.b16 %v2525
        %v2563 = vunpack.c.l.b16 %v2526
        %v2564 = vunpack.c.h.b16 %v2526
        %v2565 = vunpack.c.l.b16 %v2527
        %v2566 = vunpack.c.h.b16 %v2527
        %v2567 = vunpack.c.l.b16 %v2528
        %v2568 = vunpack.c.h.b16 %v2528
        %v2569 = vunpack.c.l.b16 %v2529
        %v2570 = vunpack.c.h.b16 %v2529
        %v2571 = vunpack.c.l.b16 %v2530
        %v2572 = vunpack.c.h.b16 %v2530
        %v2573 = vunpack.c.l.b16 %v2531
        %v2574 = vunpack.c.h.b16 %v2531
        %v2575 = vunpack.c.l.b16 %v2532
        %v2576 = vunpack.c.h.b16 %v2532
        %v2577 = vunpack.c.l.b16 %v2533
        %v2578 = vunpack.c.h.b16 %v2533
        %v2579 = vunpack.c.l.b16 %v2534
        %v2580 = vunpack.c.h.b16 %v2534
        %v2581 = vunpack.c.l.b16 %v2535
        %v2582 = vunpack.c.h.b16 %v2535
        %v2583 = vunpack.c.l.b16 %v2536
        %v2584 = vunpack.c.h.b16 %v2536
        %v2585 = vpack.c.b16 %v2553, %v2553
        %v2586 = vpack.c.b16 %v2554, %v2554
        %v2587 = vpack.c.b16 %v2555, %v2555
        %v2588 = vpack.c.b16 %v2556, %v2556
        %v2589 = vpack.c.b16 %v2557, %v2557
        %v2590 = vpack.c.b16 %v2558, %v2558
        %v2591 = vpack.c.b16 %v2559, %v2559
        %v2592 = vpack.c.b16 %v2560, %v2560
        %v2593 = vpack.c.b16 %v2561, %v2561
        %v2594 = vpack.c.b16 %v2562, %v2562
        %v2595 = vpack.c.b16 %v2563, %v2563
        %v2596 = vpack.c.b16 %v2564, %v2564
        %v2597 = vpack.c.b16 %v2565, %v2565
        %v2598 = vpack.c.b16 %v2566, %v2566
        %v2599 = vpack.c.b16 %v2567, %v2567
        %v2600 = vpack.c.b16 %v2568, %v2568
        %v2601 = vpack.c.b16 %v2569, %v2569
        %v2602 = vpack.c.b16 %v2570, %v2570
        %v2603 = vpack.c.b16 %v2571, %v2571
        %v2604 = vpack.c.b16 %v2572, %v2572
        %v2605 = vpack.c.b16 %v2573, %v2573
        %v2606 = vpack.c.b16 %v2574, %v2574
        %v2607 = vpack.c.b16 %v2575, %v2575
        %v2608 = vpack.c.b16 %v2576, %v2576
        %v2609 = vpack.c.b16 %v2577, %v2577
        %v2610 = vpack.c.b16 %v2578, %v2578
        %v2611 = vpack.c.b16 %v2579, %v2579
        %v2612 = vpack.c.b16 %v2580, %v2580
        %v2613 = vpack.c.b16 %v2581, %v2581
        %v2614 = vpack.c.b16 %v2582, %v2582
        %v2615 = vpack.c.b16 %v2583, %v2583
        %v2616 = vpack.c.b16 %v2584, %v2584
        %2649 = vst [vmem:[%s269] sm:$0xf] %v2585
        %2650 = vst [vmem:[%s269 + $0x4] sm:$0xf] %v2586
        %2651 = vst [vmem:[%s269 + $0x8] sm:$0xf] %v2587
        %2652 = vst [vmem:[%s269 + $0xc] sm:$0xf] %v2588
        %2653 = vst [vmem:[%s269 + $0x10] sm:$0xf] %v2589
        %2654 = vst [vmem:[%s269 + $0x14] sm:$0xf] %v2590
        %2655 = vst [vmem:[%s269 + $0x18] sm:$0xf] %v2591
        %2656 = vst [vmem:[%s269 + $0x1c] sm:$0xf] %v2592
        %2657 = vst [vmem:[%s269 + $0x20] sm:$0xf] %v2593
        %2658 = vst [vmem:[%s269 + $0x24] sm:$0xf] %v2594
        %2659 = vst [vmem:[%s269 + $0x28] sm:$0xf] %v2595
        %2660 = vst [vmem:[%s269 + $0x2c] sm:$0xf] %v2596
        %2661 = vst [vmem:[%s269 + $0x30] sm:$0xf] %v2597
        %2662 = vst [vmem:[%s269 + $0x34] sm:$0xf] %v2598
        %2663 = vst [vmem:[%s269 + $0x38] sm:$0xf] %v2599
        %2664 = vst [vmem:[%s269 + $0x3c] sm:$0xf] %v2600
        %2665 = vst [vmem:[%s269 + $0x40] sm:$0xf] %v2601
        %2666 = vst [vmem:[%s269 + $0x44] sm:$0xf] %v2602
        %2667 = vst [vmem:[%s269 + $0x48] sm:$0xf] %v2603
        %2668 = vst [vmem:[%s269 + $0x4c] sm:$0xf] %v2604
        %2669 = vst [vmem:[%s269 + $0x50] sm:$0xf] %v2605
        %2670 = vst [vmem:[%s269 + $0x54] sm:$0xf] %v2606
        %2671 = vst [vmem:[%s269 + $0x58] sm:$0xf] %v2607
        %2672 = vst [vmem:[%s269 + $0x5c] sm:$0xf] %v2608
        %2673 = vst [vmem:[%s269 + $0x60] sm:$0xf] %v2609
        %2674 = vst [vmem:[%s269 + $0x64] sm:$0xf] %v2610
        %2675 = vst [vmem:[%s269 + $0x68] sm:$0xf] %v2611
        %2676 = vst [vmem:[%s269 + $0x6c] sm:$0xf] %v2612
        %2677 = vst [vmem:[%s269 + $0x70] sm:$0xf] %v2613
        %2678 = vst [vmem:[%s269 + $0x74] sm:$0xf] %v2614
        %2679 = vst [vmem:[%s269 + $0x78] sm:$0xf] %v2615
        %2680 = vst [vmem:[%s269 + $0x7c] sm:$0xf] %v2616
        %s2681 = sand.u32 %s141, 1
        %s2682 = scalar_lea.sflag [#allocation4], %s2681
        %s2683 = sand.u32 %s141, 1
        %s2684 = smul.addr %s2683, 128
        %s2685 = scalar_lea.vmem [#allocation8], %s2684
        // Predicated region
        $region53: #{tpu_custom_call.1} parent=39 // pred_check
          %p2686 = pneg %p151
        $region54: #{tpu_custom_call.1} parent=39 // pred_check_branch
          %2688 = sbr.rel (%p2686) target = $region56
        $region55: #{tpu_custom_call.1} parent=39 // pred_region
          %s2689 = smul.u32 32, %s23
          %s2691 = ssub.s32 2048, 2048
          %2692 = vsyncadd %s2682, %s2691
          %s2693 = smul.addr %s2689, 64
          %s2694 = scalar_lea.hbm %s5, %s2693
          %s2695 = sshll.u32 %s2685, 4
          %s2696 = int_to_ptr.vmem [resolvable:$true] %s2695
          %2701 = dma.vmem_to_hbm [thread:$0]  %s2696, 2048, %s2694, %s2682, 64, 64, 4
        $region56: #{tpu_custom_call.1} parent=39 // pred_fallthru
          _
      $region40: #{tpu_custom_call.1} parent=5 // pred_fallthru
        _
      %p2702 = scmp.le.s32.totalorder 2, %s18
      // Predicated region
      $region57: #{tpu_custom_call.1} parent=5 // pred_check
        %p2703 = pneg %p2702
      $region58: #{tpu_custom_call.1} parent=5 // pred_check_branch
        %2705 = sbr.rel (%p2703) target = $region60
      $region59: #{tpu_custom_call.1} parent=5 // pred_region
        %s2706 = ssub.s32 %s18, 2
        // Predicated region
        $region61: #{tpu_custom_call.1} parent=59 // pred_check
          %p2707 = pneg %p157
        $region62: #{tpu_custom_call.1} parent=59 // pred_check_branch
          %2709 = sbr.rel (%p2707) target = $region64
        $region63: #{tpu_custom_call.1} parent=59 // pred_region
          %s2710 = sand.u32 %s142, 1
          %s2711 = scalar_lea.sflag [#allocation4], %s2710
          %s2712 = sand.u32 %s142, 1
          %s2713 = smul.addr %s2712, 128
          %s2714 = scalar_lea.vmem [#allocation8], %s2713
          %2715 = dma.done %s2711, 2048
        $region64: #{tpu_custom_call.1} parent=59 // pred_fallthru
          _
      $region60: #{tpu_custom_call.1} parent=5 // pred_fallthru
        _
    $region6: #{tpu_custom_call.1} parent=1 // loop_footer
      %s22 = sadd.s32 1, %s18
    $region7: #{tpu_custom_call.1} parent=1 // loop_footer_branch
      %17 = sbr.rel target = $region3
    $region8: #{tpu_custom_call.1} parent=1 // loop_exit
      _
    %2716 = vsyncpa [#allocation3], 1
    %s2717 = scalar_lea.sflag [#allocation3], 1
    %2718 = vsyncpa %s2717, 1
    %2719 = vsyncpa [#allocation6], 1
    %2720 = vsyncpa [#allocation4], 1
    %s2721 = scalar_lea.sflag [#allocation4], 1
    %2722 = vsyncpa %s2721, 1

</llo_original>
